<compile_context>
chip_gen: v5e
topology: v5e:2x2
jax: 0.10.0
libtpu: 0.0.40
codegen_flags: <defaults>
</compile_context>

<pallas_src>
import numpy as np
import jax
import jax.numpy as jnp
from jax.experimental import pallas as pl
from jax.experimental.pallas import tpu as pltpu

INNER_DIM = 64            # fixed in the torch module
TWO_INNER = 2 * INNER_DIM
NEG_BIG = 1e12            # torch's masking constant
# Python float (NOT a jnp scalar) so it lowers as a literal, not a captured const.
TRI_NEG = float(NEG_BIG / (INNER_DIM ** 0.5))   # 1e12 / 8


def _vmem_capacity_bytes():
    """Physical VMEM per core; falls back to 128 MiB if unqueryable."""
    try:
        return int(pltpu.get_tpu_info().vmem_capacity_bytes)
    except Exception:
        return 128 * 1024 * 1024


def _pick_tq(s_pad, vmem_cap):
    """Query-row tile: 512 on v5e/v6e, 256 on v7x-sized VMEM; must divide s_pad."""
    tq_max = 256 if vmem_cap <= 64 * 1024 * 1024 else 512
    for cand in (tq_max, 256, 128):
        if cand <= s_pad and s_pad % cand == 0:
            return cand
    return s_pad  # s_pad < 128 never happens (we pad to a multiple of 128)


def _make_global_pointer_kernel(tl, tq, use_rope):
    """Kernel for one grid step = (batch b, label-group h, query-row tile q).

    Refs (use_rope=True):
      x_ref   : (1, S, H)          sequence_output for batch b
      w_ref   : (1, H, TL*128)     dense weight slab for label group h (streamed)
      b_ref   : (1, 1, TL*128)     dense bias slab for label group h
      cos_ref : (S, TL*128)        tiled repeat-interleaved cos terms
      sin_ref : (S, TL*128)        tiled repeat-interleaved sin terms
      r_ref   : (TL*128, TL*128)   block-diag pair-swap/sign matrix
      msk_ref : (1, 2, S)          row 0: mask/sqrt(64); row 1: -(1-mask)*1e12/8
      out_ref : (1, TL, TQ, S)     logits[b, h*TL:h*TL+TL, q*TQ:q*TQ+TQ, :]
      qk_scr  : (S, TL*128) VMEM   persistent projection scratch
    """

    def _project(x_ref, w_ref, b_ref, cos_ref, sin_ref, r_ref, qk_scr):
        x = x_ref[0]                                          # (S, H)
        qk = jnp.dot(x, w_ref[0],
                     preferred_element_type=jnp.float32) + b_ref[0]
        if use_rope:
            # Fused RoPE: one wide matmul rotates every 64-wide q/k chunk.
            qk2 = jnp.dot(qk, r_ref[...], preferred_element_type=jnp.float32)
            qk = qk * cos_ref[...] + qk2 * sin_ref[...]
        qk_scr[...] = qk

    def _epilogue(msk_ref, out_ref, qk_scr):
        qi = pl.program_id(2)
        s_pad = qk_scr.shape[0]
        row0 = pl.multiple_of(qi * tq, tq)
        msk = msk_ref[0]                      # (2, S)
        pm_scaled = msk[0:1, :]               # (1, S)  mask * 1/sqrt(64)
        neg_row = msk[1:2, :]                 # (1, S)  -(1-mask) * 1e12/8
        # Fold padding mask + strict-lower-triangle mask into ONE additive bias
        # (computed once per grid step, shared by all TL labels).
        rows = qi * tq + jax.lax.broadcasted_iota(jnp.int32, (tq, s_pad), 0)
        cols = jax.lax.broadcasted_iota(jnp.int32, (tq, s_pad), 1)
        add_bias = neg_row + jnp.where(rows > cols, -TRI_NEG, 0.0)   # (tq, S)
        for t in range(tl):
            base = t * TWO_INNER
            qw = qk_scr[pl.ds(row0, tq), base:base + INNER_DIM]        # (tq, 64)
            kw = qk_scr[:, base + INNER_DIM:base + TWO_INNER]          # (S, 64)
            # logits[m, n] = sum_d qw[m, d] * kw[n, d]
            logits = jax.lax.dot_general(
                qw, kw, (((1,), (1,)), ((), ())),
                preferred_element_type=jnp.float32)
            # (logits*pm - (1-pm)*1e12 - tril*1e12) / sqrt(64), scale pre-folded.
            out_ref[0, t] = (logits * pm_scaled + add_bias).astype(out_ref.dtype)

    if use_rope:
        def kernel(x_ref, w_ref, b_ref, cos_ref, sin_ref, r_ref, msk_ref,
                   out_ref, qk_scr):
            @pl.when(pl.program_id(2) == 0)
            def _():
                _project(x_ref, w_ref, b_ref, cos_ref, sin_ref, r_ref, qk_scr)
            _epilogue(msk_ref, out_ref, qk_scr)
    else:
        def kernel(x_ref, w_ref, b_ref, msk_ref, out_ref, qk_scr):
            @pl.when(pl.program_id(2) == 0)
            def _():
                _project(x_ref, w_ref, b_ref, None, None, None, qk_scr)
            _epilogue(msk_ref, out_ref, qk_scr)

    return kernel


def global_pointer_forward(sequence_output, attention_mask, W, bias,
                           num_labels, use_rope=True, out_dtype=jnp.float32):
    """Pallas GlobalPointer forward.

    sequence_output: (B, S, H) float32
    attention_mask : (B, S)    float32 (0/1)
    W              : (H, num_labels * 2 * INNER_DIM) float32  (x @ W layout)
    bias           : (num_labels * 2 * INNER_DIM,)   float32
    returns        : (B, num_labels, S, S) float32 (or out_dtype)
    """
    B, S, H = sequence_output.shape
    L = num_labels
    TL = 2 if (L % 2 == 0) else 1      # labels per step: 256-wide MXU when even
    n_steps = L // TL
    wblk = TL * TWO_INNER
    scale = 1.0 / float(np.sqrt(INNER_DIM))     # 0.125, exact in f32

    # --- pad S to a multiple of 128 so output stores are lane-dense ---
    S_pad = ((S + 127) // 128) * 128
    am = attention_mask.astype(jnp.float32)
    if S_pad != S:
        pad = S_pad - S
        x_in = jnp.pad(sequence_output, ((0, 0), (0, pad), (0, 0)))
        am = jnp.pad(am, ((0, 0), (0, pad)))
    else:
        x_in = sequence_output

    vmem_cap = _vmem_capacity_bytes()
    TQ = _pick_tq(S_pad, vmem_cap)
    n_q = S_pad // TQ

    # --- glue (host-side, computed once) ---
    W3 = jnp.transpose(W.reshape(H, n_steps, wblk), (1, 0, 2))   # (n_steps,H,wblk)
    bias3 = bias.reshape(n_steps, 1, wblk)                       # (n_steps,1,wblk)
    # row 0: mask * 1/sqrt(64) ; row 1: -(1-mask) * 1e12/sqrt(64)
    mask_rows = jnp.stack([am * scale, -(1.0 - am) * (NEG_BIG * scale)],
                          axis=1)                                # (B, 2, S_pad)

    inputs = [x_in, W3, bias3]
    in_specs = [
        pl.BlockSpec((1, S_pad, H), lambda b, h, q: (b, 0, 0)),       # x
        pl.BlockSpec((1, H, wblk), lambda b, h, q: (h, 0, 0)),        # W slab (streamed)
        pl.BlockSpec((1, 1, wblk), lambda b, h, q: (h, 0, 0)),        # bias slab
    ]

    if use_rope:
        pos = jnp.arange(S_pad, dtype=jnp.float32)[:, None]           # (S_pad, 1)
        idx = jnp.arange(INNER_DIM // 2, dtype=jnp.float32)
        theta = jnp.power(1000.0, -2.0 * idx / INNER_DIM)
        ang = pos * theta                                             # (S_pad, 32)
        cos64 = jnp.repeat(jnp.cos(ang), 2, axis=-1)                  # (S_pad, 64)
        sin64 = jnp.repeat(jnp.sin(ang), 2, axis=-1)                  # (S_pad, 64)
        cos_tl = jnp.tile(cos64, (1, 2 * TL))                         # (S_pad, wblk)
        sin_tl = jnp.tile(sin64, (1, 2 * TL))                         # (S_pad, wblk)

        # 64x64 pair-swap/sign matrix: (t @ R)[2i] = -t[2i+1], (t @ R)[2i+1] = t[2i]
        R = np.zeros((INNER_DIM, INNER_DIM), np.float32)
        for i in range(INNER_DIM // 2):
            R[2 * i + 1, 2 * i] = -1.0
            R[2 * i, 2 * i + 1] = 1.0
        # block-diagonal across every 64-wide q/k chunk -> one wide MXU op.
        R_big = jnp.asarray(np.kron(np.eye(2 * TL, dtype=np.float32), R))

        inputs += [cos_tl, sin_tl, R_big]
        in_specs += [
            pl.BlockSpec((S_pad, wblk), lambda b, h, q: (0, 0)),      # cos
            pl.BlockSpec((S_pad, wblk), lambda b, h, q: (0, 0)),      # sin
            pl.BlockSpec((wblk, wblk), lambda b, h, q: (0, 0)),       # R_big
        ]

    inputs += [mask_rows]
    in_specs += [pl.BlockSpec((1, 2, S_pad), lambda b, h, q: (b, 0, 0))]

    kernel = _make_global_pointer_kernel(TL, TQ, use_rope)

    # advisory cost estimate
    flops = 2.0 * B * S_pad * H * L * TWO_INNER \
        + 2.0 * B * L * S_pad * S_pad * INNER_DIM
    if use_rope:
        flops += 2.0 * B * n_steps * S_pad * wblk * wblk
    bytes_out = B * L * S_pad * S_pad * np.dtype(out_dtype).itemsize
    bytes_in = 4 * (x_in.size + W3.size + bias3.size + mask_rows.size)
    cost = pl.CostEstimate(flops=int(flops), transcendentals=0,
                           bytes_accessed=int(bytes_in + bytes_out))

    fn = pl.pallas_call(
        kernel,
        out_shape=jax.ShapeDtypeStruct((B, L, S_pad, S_pad), out_dtype),
        grid=(B, n_steps, n_q),
        in_specs=in_specs,
        out_specs=pl.BlockSpec((1, TL, TQ, S_pad), lambda b, h, q: (b, h, q, 0)),
        scratch_shapes=[pltpu.VMEM((S_pad, wblk), jnp.float32)],
        compiler_params=pltpu.CompilerParams(
            # B and label-group axes shard across cores; the row-tile axis is a
            # sequential dependency (qk scratch written at q==0).
            dimension_semantics=("parallel", "parallel", "arbitrary"),
            vmem_limit_bytes=int(vmem_cap * 3 // 4)),
        cost_estimate=cost,
    )
    out = fn(*inputs)
    if S_pad != S:
        out = out[:, :, :S, :S]
    return out


def _reference(sequence_output, attention_mask, W, bias, num_labels,
               use_rope=True):
    """Pure-JAX reference mirroring the torch forward."""
    B, S, H = sequence_output.shape
    L = num_labels
    out = jnp.dot(sequence_output, W,
                  precision=jax.lax.Precision.HIGHEST) + bias
    out = out.reshape(B, S, L, TWO_INNER)
    qw, kw = out[..., :INNER_DIM], out[..., INNER_DIM:]

    if use_rope:
        pos = jnp.arange(S, dtype=jnp.float32)[:, None]
        idx = jnp.arange(INNER_DIM // 2, dtype=jnp.float32)
        theta = jnp.power(1000.0, -2.0 * idx / INNER_DIM)
        ang = pos * theta
        cos = jnp.repeat(jnp.cos(ang), 2, axis=-1)[None, :, None, :]
        sin = jnp.repeat(jnp.sin(ang), 2, axis=-1)[None, :, None, :]

        def rot(t):
            t2 = jnp.stack([-t[..., 1::2], t[..., ::2]], axis=-1).reshape(t.shape)
            return t * cos + t2 * sin

        qw, kw = rot(qw), rot(kw)

    logits = jnp.einsum('bmhd,bnhd->bhmn', qw, kw,
                        precision=jax.lax.Precision.HIGHEST)
    pm = attention_mask[:, None, None, :]
    logits = logits * pm - (1.0 - pm) * NEG_BIG
    tri = jnp.tril(jnp.ones((S, S), jnp.float32), -1)
    logits = logits - tri * NEG_BIG
    return logits / (INNER_DIM ** 0.5)


if __name__ == "__main__":
    B, S, H = 2, 8, 32
    NUM_LABELS = 4          # even -> exercises the 2-labels-per-step path

    key = jax.random.PRNGKey(0)
    k_x, k_w, k_b = jax.random.split(key, 3)

    sequence_output = jax.random.normal(k_x, (B, S, H), dtype=jnp.float32)
    # synthetic dense params (torch: Linear(H, num_labels*2*64)), stored as x@W
    W = 0.05 * jax.random.normal(k_w, (H, NUM_LABELS * TWO_INNER),
                                 dtype=jnp.float32)
    bias = 0.05 * jax.random.normal(k_b, (NUM_LABELS * TWO_INNER,),
                                    dtype=jnp.float32)
    # attention mask: first batch fully valid, second batch padded after 5 tokens
    attention_mask = jnp.array(
        [[1, 1, 1, 1, 1, 1, 1, 1],
         [1, 1, 1, 1, 1, 0, 0, 0]], dtype=jnp.float32)

    rows = jnp.arange(S)[:, None]
    cols = jnp.arange(S)[None, :]
    # torch masks only the key dim with the pad mask, plus the strict lower tri.
    unmasked = (attention_mask[:, None, None, :] > 0) & (rows <= cols)[None, None]

    for use_rope in (True, False):
        out = global_pointer_forward(sequence_output, attention_mask, W, bias,
                                     NUM_LABELS, use_rope=use_rope)
        out = jax.block_until_ready(out)
        ref = _reference(sequence_output, attention_mask, W, bias,
                         NUM_LABELS, use_rope=use_rope)
        ref = jax.block_until_ready(ref)

        assert out.shape == (B, NUM_LABELS, S, S), out.shape
        # loose full-tensor check (masked entries are ~1e11, catches gross errors)
        assert jnp.allclose(out, ref, rtol=2e-2, atol=2e-2), (
            use_rope, float(jnp.max(jnp.abs(out - ref))))
        # tight check restricted to the unmasked region
        err = jnp.max(jnp.abs(jnp.where(unmasked, out - ref, 0.0)))
        assert float(err) < 1e-2, (use_rope, float(err))

    print("KERNEL_OK")
</pallas_src>

<mosaic_0001>
module attributes {stable_mosaic.version = 11 : i64} {
  func.func @kernel(%arg0: i32, %arg1: i32, %arg2: i32, %arg3: memref<1x128x32xf32, #tpu.memory_space<vmem>>, %arg4: memref<1x32x256xf32, #tpu.memory_space<vmem>>, %arg5: memref<1x1x256xf32, #tpu.memory_space<vmem>>, %arg6: memref<128x256xf32, #tpu.memory_space<vmem>>, %arg7: memref<128x256xf32, #tpu.memory_space<vmem>>, %arg8: memref<256x256xf32, #tpu.memory_space<vmem>>, %arg9: memref<1x2x128xf32, #tpu.memory_space<vmem>>, %arg10: memref<1x2x128x128xf32, #tpu.memory_space<vmem>>, %arg11: memref<128x256xf32, #tpu.memory_space<vmem>>) attributes {dimension_semantics = [#tpu.dimension_semantics<parallel>, #tpu.dimension_semantics<parallel>, #tpu.dimension_semantics<arbitrary>], iteration_bounds = array<i64: 2, 2, 1>, scalar_prefetch = 0 : i64, scratch_operands = 1 : i64, tpu.core_type = #tpu.core_type<tc>, window_params = [{transform_indices = @transform_0, window_bounds = array<i64: 1, 128, 32>}, {transform_indices = @transform_1, window_bounds = array<i64: 1, 32, 256>}, {transform_indices = @transform_2, window_bounds = array<i64: 1, 1, 256>}, {pipeline_mode = #tpu.pipeline_mode<synchronous>, transform_indices = @transform_3, window_bounds = array<i64: 128, 256>}, {pipeline_mode = #tpu.pipeline_mode<synchronous>, transform_indices = @transform_4, window_bounds = array<i64: 128, 256>}, {pipeline_mode = #tpu.pipeline_mode<synchronous>, transform_indices = @transform_5, window_bounds = array<i64: 256, 256>}, {transform_indices = @transform_6, window_bounds = array<i64: 1, 2, 128>}, {transform_indices = @transform_7, window_bounds = array<i64: 1, 2, 128, 128>}]} {
    %c0_i32 = arith.constant 0 : i32
    %0 = arith.cmpi eq, %arg2, %c0_i32 : i32
    %1 = arith.extui %0 : i1 to i32
    %c0_i32_0 = arith.constant 0 : i32
    %2 = arith.cmpi ne, %1, %c0_i32_0 : i32
    scf.if %2 {
      %c0_17 = arith.constant 0 : index
      %c0_18 = arith.constant 0 : index
      %c0_19 = arith.constant 0 : index
      %40 = vector.load %arg3[%c0_17, %c0_18, %c0_19] : memref<1x128x32xf32, #tpu.memory_space<vmem>>, vector<1x128x32xf32>
      %41 = vector.shape_cast %40 : vector<1x128x32xf32> to vector<128x32xf32>
      %c0_20 = arith.constant 0 : index
      %c0_21 = arith.constant 0 : index
      %c0_22 = arith.constant 0 : index
      %42 = vector.load %arg4[%c0_20, %c0_21, %c0_22] : memref<1x32x256xf32, #tpu.memory_space<vmem>>, vector<1x32x256xf32>
      %43 = vector.shape_cast %42 : vector<1x32x256xf32> to vector<32x256xf32>
      %cst_23 = arith.constant dense<0.000000e+00> : vector<128x256xf32>
      %44 = tpu.matmul %41, %43, %cst_23 {dimension_numbers = #tpu.dot_dimension_numbers<[1], [0], [0], [1], [0, 0, 1, 1], [], []>} : vector<128x32xf32>, vector<32x256xf32>, vector<128x256xf32> -> vector<128x256xf32>
      %c0_24 = arith.constant 0 : index
      %c0_25 = arith.constant 0 : index
      %c0_26 = arith.constant 0 : index
      %45 = vector.load %arg5[%c0_24, %c0_25, %c0_26] : memref<1x1x256xf32, #tpu.memory_space<vmem>>, vector<1x1x256xf32>
      %46 = vector.shape_cast %45 : vector<1x1x256xf32> to vector<1x256xf32>
      %47 = vector.broadcast %46 : vector<1x256xf32> to vector<128x256xf32>
      %48 = arith.addf %44, %47 : vector<128x256xf32>
      %c0_27 = arith.constant 0 : index
      %c0_28 = arith.constant 0 : index
      %49 = vector.load %arg8[%c0_27, %c0_28] : memref<256x256xf32, #tpu.memory_space<vmem>>, vector<256x256xf32>
      %cst_29 = arith.constant dense<0.000000e+00> : vector<128x256xf32>
      %50 = tpu.matmul %48, %49, %cst_29 {dimension_numbers = #tpu.dot_dimension_numbers<[1], [0], [0], [1], [0, 0, 1, 1], [], []>} : vector<128x256xf32>, vector<256x256xf32>, vector<128x256xf32> -> vector<128x256xf32>
      %c0_30 = arith.constant 0 : index
      %c0_31 = arith.constant 0 : index
      %51 = vector.load %arg6[%c0_30, %c0_31] : memref<128x256xf32, #tpu.memory_space<vmem>>, vector<128x256xf32>
      %52 = arith.mulf %48, %51 : vector<128x256xf32>
      %c0_32 = arith.constant 0 : index
      %c0_33 = arith.constant 0 : index
      %53 = vector.load %arg7[%c0_32, %c0_33] : memref<128x256xf32, #tpu.memory_space<vmem>>, vector<128x256xf32>
      %54 = arith.mulf %50, %53 : vector<128x256xf32>
      %55 = arith.addf %52, %54 : vector<128x256xf32>
      %c0_34 = arith.constant 0 : index
      %c0_35 = arith.constant 0 : index
      %56 = vector.load %arg11[%c0_34, %c0_35] : memref<128x256xf32, #tpu.memory_space<vmem>>, vector<128x256xf32>
      tpu.vector_store %arg11[%c0_34, %c0_35], %55 {strides = array<i32>} : memref<128x256xf32, #tpu.memory_space<vmem>>, vector<128x256xf32>,
    } else {
    }
    %c128_i32 = arith.constant 128 : i32
    %3 = arith.muli %arg2, %c128_i32 : i32
    %4 = tpu.assume_multiple %3, 128 : i32
    %c0 = arith.constant 0 : index
    %c0_1 = arith.constant 0 : index
    %c0_2 = arith.constant 0 : index
    %5 = vector.load %arg9[%c0, %c0_1, %c0_2] : memref<1x2x128xf32, #tpu.memory_space<vmem>>, vector<1x2x128xf32>
    %6 = vector.shape_cast %5 : vector<1x2x128xf32> to vector<2x128xf32>
    %7 = vector.extract_strided_slice %6 {offsets = [0, 0], sizes = [1, 128], strides = [1, 1]} : vector<2x128xf32> to vector<1x128xf32>
    %8 = vector.extract_strided_slice %6 {offsets = [1, 0], sizes = [1, 128], strides = [1, 1]} : vector<2x128xf32> to vector<1x128xf32>
    %c128_i32_3 = arith.constant 128 : i32
    %9 = arith.muli %arg2, %c128_i32_3 : i32
    %10 = tpu.iota {dimensions = array<i32: 0>} : vector<128x128xi32>
    %11 = vector.broadcast %9 : i32 to vector<128x128xi32>
    %12 = arith.addi %11, %10 : vector<128x128xi32>
    %13 = tpu.iota {dimensions = array<i32: 1>} : vector<128x128xi32>
    %14 = arith.cmpi sgt, %12, %13 : vector<128x128xi32>
    %cst = arith.constant -1.250000e+11 : f32
    %cst_4 = arith.constant 0.000000e+00 : f32
    %15 = vector.broadcast %cst : f32 to vector<128x128xf32>
    %16 = vector.broadcast %cst_4 : f32 to vector<128x128xf32>
    %17 = arith.select %14, %15, %16 : vector<128x128xi1>, vector<128x128xf32>
    %18 = vector.broadcast %8 : vector<1x128xf32> to vector<128x128xf32>
    %19 = arith.addf %18, %17 : vector<128x128xf32>
    %20 = arith.index_cast %4 : i32 to index
    %c0_5 = arith.constant 0 : index
    %21 = vector.load %arg11[%20, %c0_5] : memref<128x256xf32, #tpu.memory_space<vmem>>, vector<128x64xf32>
    %c0_6 = arith.constant 0 : index
    %c64 = arith.constant 64 : index
    %22 = vector.load %arg11[%c0_6, %c64] : memref<128x256xf32, #tpu.memory_space<vmem>>, vector<128x64xf32>
    %cst_7 = arith.constant dense<0.000000e+00> : vector<128x128xf32>
    %23 = tpu.matmul %21, %22, %cst_7 {dimension_numbers = #tpu.dot_dimension_numbers<[1], [1], [0], [0], [0, 0, 1, 0], [], []>} : vector<128x64xf32>, vector<128x64xf32>, vector<128x128xf32> -> vector<128x128xf32>
    %24 = vector.broadcast %7 : vector<1x128xf32> to vector<128x128xf32>
    %25 = arith.mulf %23, %24 : vector<128x128xf32>
    %26 = arith.addf %25, %19 : vector<128x128xf32>
    %c0_8 = arith.constant 0 : index
    %c0_9 = arith.constant 0 : index
    %c0_10 = arith.constant 0 : index
    %c0_11 = arith.constant 0 : index
    %27 = vector.load %arg10[%c0_8, %c0_9, %c0_10, %c0_11] : memref<1x2x128x128xf32, #tpu.memory_space<vmem>>, vector<1x1x128x128xf32>
    %28 = vector.shape_cast %27 : vector<1x1x128x128xf32> to vector<128x128xf32>
    %29 = vector.shape_cast %26 : vector<128x128xf32> to vector<1x1x128x128xf32>
    tpu.vector_store %arg10[%c0_8, %c0_9, %c0_10, %c0_11], %29 {strides = array<i32>} : memref<1x2x128x128xf32, #tpu.memory_space<vmem>>, vector<1x1x128x128xf32>,
    %30 = arith.index_cast %4 : i32 to index
    %c128 = arith.constant 128 : index
    %31 = vector.load %arg11[%30, %c128] : memref<128x256xf32, #tpu.memory_space<vmem>>, vector<128x64xf32>
    %c0_12 = arith.constant 0 : index
    %c192 = arith.constant 192 : index
    %32 = vector.load %arg11[%c0_12, %c192] : memref<128x256xf32, #tpu.memory_space<vmem>>, vector<128x64xf32>
    %cst_13 = arith.constant dense<0.000000e+00> : vector<128x128xf32>
    %33 = tpu.matmul %31, %32, %cst_13 {dimension_numbers = #tpu.dot_dimension_numbers<[1], [1], [0], [0], [0, 0, 1, 0], [], []>} : vector<128x64xf32>, vector<128x64xf32>, vector<128x128xf32> -> vector<128x128xf32>
    %34 = vector.broadcast %7 : vector<1x128xf32> to vector<128x128xf32>
    %35 = arith.mulf %33, %34 : vector<128x128xf32>
    %36 = arith.addf %35, %19 : vector<128x128xf32>
    %c0_14 = arith.constant 0 : index
    %c1 = arith.constant 1 : index
    %c0_15 = arith.constant 0 : index
    %c0_16 = arith.constant 0 : index
    %37 = vector.load %arg10[%c0_14, %c1, %c0_15, %c0_16] : memref<1x2x128x128xf32, #tpu.memory_space<vmem>>, vector<1x1x128x128xf32>
    %38 = vector.shape_cast %37 : vector<1x1x128x128xf32> to vector<128x128xf32>
    %39 = vector.shape_cast %36 : vector<128x128xf32> to vector<1x1x128x128xf32>
    tpu.vector_store %arg10[%c0_14, %c1, %c0_15, %c0_16], %39 {strides = array<i32>} : memref<1x2x128x128xf32, #tpu.memory_space<vmem>>, vector<1x1x128x128xf32>,
    return
  }
  func.func @transform_0(%arg0: i32, %arg1: i32, %arg2: i32) -> (i32, i32, i32) {
    %c0_i32 = arith.constant 0 : i32
    %c0_i32_0 = arith.constant 0 : i32
    %c0_i32_1 = arith.constant 0 : i32
    return %arg0, %c0_i32, %c0_i32_0 : i32, i32, i32
  }
  func.func @transform_1(%arg0: i32, %arg1: i32, %arg2: i32) -> (i32, i32, i32) {
    %c0_i32 = arith.constant 0 : i32
    %c0_i32_0 = arith.constant 0 : i32
    %c0_i32_1 = arith.constant 0 : i32
    return %arg1, %c0_i32, %c0_i32_0 : i32, i32, i32
  }
  func.func @transform_2(%arg0: i32, %arg1: i32, %arg2: i32) -> (i32, i32, i32) {
    %c0_i32 = arith.constant 0 : i32
    %c0_i32_0 = arith.constant 0 : i32
    %c0_i32_1 = arith.constant 0 : i32
    return %arg1, %c0_i32, %c0_i32_0 : i32, i32, i32
  }
  func.func @transform_3(%arg0: i32, %arg1: i32, %arg2: i32) -> (i32, i32) {
    %c0_i32 = arith.constant 0 : i32
    %c0_i32_0 = arith.constant 0 : i32
    %c0_i32_1 = arith.constant 0 : i32
    return %c0_i32, %c0_i32_0 : i32, i32
  }
  func.func @transform_4(%arg0: i32, %arg1: i32, %arg2: i32) -> (i32, i32) {
    %c0_i32 = arith.constant 0 : i32
    %c0_i32_0 = arith.constant 0 : i32
    %c0_i32_1 = arith.constant 0 : i32
    return %c0_i32, %c0_i32_0 : i32, i32
  }
  func.func @transform_5(%arg0: i32, %arg1: i32, %arg2: i32) -> (i32, i32) {
    %c0_i32 = arith.constant 0 : i32
    %c0_i32_0 = arith.constant 0 : i32
    %c0_i32_1 = arith.constant 0 : i32
    return %c0_i32, %c0_i32_0 : i32, i32
  }
  func.func @transform_6(%arg0: i32, %arg1: i32, %arg2: i32) -> (i32, i32, i32) {
    %c0_i32 = arith.constant 0 : i32
    %c0_i32_0 = arith.constant 0 : i32
    %c0_i32_1 = arith.constant 0 : i32
    return %arg0, %c0_i32, %c0_i32_0 : i32, i32, i32
  }
  func.func @transform_7(%arg0: i32, %arg1: i32, %arg2: i32) -> (i32, i32, i32, i32) {
    %c0_i32 = arith.constant 0 : i32
    %c0_i32_0 = arith.constant 0 : i32
    return %arg0, %arg1, %arg2, %c0_i32 : i32, i32, i32, i32
  }
}

</mosaic_0001>

<llo_original>
// kernel: tpu_custom_call.1
$region0: #{tpu_custom_call.1}
  #allocation0 [shape = 'u32[]', space=smem, size = 0x4, offset = 0x4, fixed_abs, tag = 'smem constant byte address 0x4 - core index']
  #allocation1 [shape = 'u32[72,128]{1,0:T(1,128)}', space=vmem, size = 0x9000, scoped, tag = 'internal scratch']
  #allocation2 [shape = 'f32[128,256]{1,0:T(8,128)}', space=vmem, size = 0x20000, scoped, tag = 'scratch operand']
  %s0 = inlined_call_operand.vmem [shape: f32[2,128,32], index: 0, kind: input, shape index: {}]
  %s1 = inlined_call_operand.hbm [shape: f32[2,32,256], index: 1, kind: input, shape index: {}]
  %s2 = inlined_call_operand.vmem [shape: f32[2,1,256], index: 2, kind: input, shape index: {}]
  %s3 = inlined_call_operand.vmem [shape: f32[128,256], index: 3, kind: input, shape index: {}]
  %s4 = inlined_call_operand.hbm [shape: f32[128,256], index: 4, kind: input, shape index: {}]
  %s5 = inlined_call_operand.hbm [shape: f32[256,256], index: 5, kind: input, shape index: {}]
  %s6 = inlined_call_operand.vmem [shape: f32[2,2,128], index: 6, kind: input, shape index: {}]
  %s7 = inlined_call_operand.hbm [shape: f32[2,4,128,128], index: 7, kind: output, shape index: {}]
  %s8 = sld [smem:[#allocation0]]
  $region77: #{tpu_custom_call.1} parent=0
    _
  %s10 = ssub.s32 1, %s8
  %s11 = scalar_select 0, %s10, %s8
  $region1: #{tpu_custom_call.1} parent=0
    #allocation3 [shape = 'u8[65536]{0}', space=vmem, size = 0x10000, scoped, tag = 'input window, operand 1']
    #allocation4 [shape = 's32[2]{0}', space=sflag, size = 0x8, scoped, tag = 'scoped memory for tpu_custom_call.1']
    #allocation5 [shape = 's32[2]{0}', space=sflag, size = 0x8, scoped, tag = 'scoped memory for tpu_custom_call.1']
    #allocation6 [shape = 'u8[131072]{0}', space=vmem, size = 0x20000, scoped, tag = 'input window, operand 4, single buffered']
    #allocation7 [shape = 's32[1]{0}', space=sflag, size = 0x4, scoped, tag = 'scoped memory for tpu_custom_call.1']
    #allocation8 [shape = 'u8[262144]{0}', space=vmem, size = 0x40000, scoped, tag = 'input window, operand 5, single buffered']
    #allocation9 [shape = 'u8[262144]{0}', space=vmem, size = 0x40000, scoped, tag = 'output window, operand 0']
    %12 = vsyncpa [#allocation4], 0
    %s13 = scalar_lea.sflag [#allocation4], 1
    %14 = vsyncpa %s13, 0
    %15 = vsyncpa [#allocation7], 0
    %16 = vsyncpa [#allocation5], 0
    %s17 = scalar_lea.sflag [#allocation5], 1
    %18 = vsyncpa %s17, 0
    loop: start=0, step=1, limit=6
    $region2: #{tpu_custom_call.1} parent=1 // loop_pre_header
      _
    $region3: #{tpu_custom_call.1} parent=1 // loop_header
      %s20 = sphi 0, %s24
      %p21 = scmp.ge.s32.totalorder %s20, 6
      %s27 = sphi 0, %s46
      %s28 = sphi 0, %s42
      %s29 = sphi 0, %s38
      %s30 = sphi 0, %s27
      %s31 = sphi 0, %s28
      %s32 = sphi 0, %s29
      %s33 = sphi 0, %s30
      %s34 = sphi 0, %s31
      %s35 = sphi 0, %s32
      %s49 = sphi 0, %s51
      %s52 = sphi 0, %s49
      %s53 = sphi 0, %s52
      %s69 = sphi 0, %s53
      %s75 = sphi 0, %s77
      %s78 = sphi 0, %s75
      %s79 = sphi 0, %s78
      %s95 = sphi 0, %s79
      %s101 = sphi 0, %s103
      %s104 = sphi 0, %s101
      %s105 = sphi 0, %s104
      %s121 = sphi 0, %s105
      %s125 = sphi 0, %s125
      %s127 = sphi 0, %s125
      %s128 = sphi 0, %s127
      %s142 = sphi 0, %s128
      %s146 = sphi 0, %s146
      %s148 = sphi 0, %s146
      %s149 = sphi 0, %s148
      %s163 = sphi 0, %s149
      %s167 = sphi 0, %s167
      %s169 = sphi 0, %s167
      %s170 = sphi 0, %s169
      %s184 = sphi 0, %s170
      %s190 = sphi 0, %s192
      %s193 = sphi 0, %s190
      %s194 = sphi 0, %s193
      %s210 = sphi 0, %s194
      %s220 = sphi 0, %s222
      %s223 = sphi 0, %s220
      %s224 = sphi 0, %s223
      %s240 = sphi 0, %s224
    $region4: #{tpu_custom_call.1} parent=1 // loop_header_branch
      %23 = sbr.rel (%p21) target = $region8
    $region5: #{tpu_custom_call.1} parent=1 // loop_body
      %s25 = ssub.s32 %s20, 1
      %s26 = ssub.s32 %s20, 2
      %s36 = sadd.s32 1, %s29
      %p37 = scmp.ge.s32.totalorder %s36, 1
      %s38 = scalar_select %p37, 0, %s36
      %s39 = sadd.s32 1, %s28
      %s40 = scalar_select %p37, %s39, %s28
      %p41 = scmp.ge.s32.totalorder %s40, 2
      %s42 = scalar_select %p41, 0, %s40
      %s43 = sadd.s32 1, %s27
      %s44 = scalar_select %p41, %s43, %s27
      %p45 = scmp.ge.s32.totalorder %s44, 2
      %s46 = scalar_select %p45, 0, %s44
      %s47 = ssub.s32 %s27, %s46
      %p48 = scmp.eq.s32.totalorder %s47, 0
      %s50 = sadd.s32 %s49, 1
      %s51 = scalar_select %p48, %s49, %s50
      %p54 = pneg %p48
      %p55 = scmp.eq.s32.totalorder %s20, 3
      %p56 = por %p54, %p55
      %p57 = scmp.ne.s32.totalorder %s49, %s52
      %p58 = scmp.eq.s32.totalorder %s20, 0
      %p59 = por %p57, %p58
      %p60 = scmp.ne.s32.totalorder %s49, %s52
      %p61 = scmp.eq.s32.totalorder %s25, 3
      %p62 = por %p60, %p61
      %p63 = scmp.ne.s32.totalorder %s52, %s53
      %p64 = scmp.eq.s32.totalorder %s25, 0
      %p65 = por %p63, %p64
      %p66 = scmp.ne.s32.totalorder %s52, %s53
      %p67 = scmp.eq.s32.totalorder %s26, 3
      %p68 = por %p66, %p67
      %p70 = scmp.ne.s32.totalorder %s53, %s69
      %p71 = scmp.eq.s32.totalorder %s26, 0
      %p72 = por %p70, %p71
      %s73 = ssub.s32 %s28, %s42
      %p74 = scmp.eq.s32.totalorder %s73, 0
      %s76 = sadd.s32 %s75, 1
      %s77 = scalar_select %p74, %s75, %s76
      %p80 = pneg %p74
      %p81 = scmp.eq.s32.totalorder %s20, 3
      %p82 = por %p80, %p81
      %p83 = scmp.ne.s32.totalorder %s75, %s78
      %p84 = scmp.eq.s32.totalorder %s20, 0
      %p85 = por %p83, %p84
      %p86 = scmp.ne.s32.totalorder %s75, %s78
      %p87 = scmp.eq.s32.totalorder %s25, 3
      %p88 = por %p86, %p87
      %p89 = scmp.ne.s32.totalorder %s78, %s79
      %p90 = scmp.eq.s32.totalorder %s25, 0
      %p91 = por %p89, %p90
      %p92 = scmp.ne.s32.totalorder %s78, %s79
      %p93 = scmp.eq.s32.totalorder %s26, 3
      %p94 = por %p92, %p93
      %p96 = scmp.ne.s32.totalorder %s79, %s95
      %p97 = scmp.eq.s32.totalorder %s26, 0
      %p98 = por %p96, %p97
      %s99 = ssub.s32 %s28, %s42
      %p100 = scmp.eq.s32.totalorder %s99, 0
      %s102 = sadd.s32 %s101, 1
      %s103 = scalar_select %p100, %s101, %s102
      %p106 = pneg %p100
      %p107 = scmp.eq.s32.totalorder %s20, 3
      %p108 = por %p106, %p107
      %p109 = scmp.ne.s32.totalorder %s101, %s104
      %p110 = scmp.eq.s32.totalorder %s20, 0
      %p111 = por %p109, %p110
      %p112 = scmp.ne.s32.totalorder %s101, %s104
      %p113 = scmp.eq.s32.totalorder %s25, 3
      %p114 = por %p112, %p113
      %p115 = scmp.ne.s32.totalorder %s104, %s105
      %p116 = scmp.eq.s32.totalorder %s25, 0
      %p117 = por %p115, %p116
      %p118 = scmp.ne.s32.totalorder %s104, %s105
      %p119 = scmp.eq.s32.totalorder %s26, 3
      %p120 = por %p118, %p119
      %p122 = scmp.ne.s32.totalorder %s105, %s121
      %p123 = scmp.eq.s32.totalorder %s26, 0
      %p124 = por %p122, %p123
      %s126 = sadd.s32 %s125, 1
      %p129 = scmp.eq.s32.totalorder %s20, 3
      %p130 = scmp.ne.s32.totalorder %s125, %s127
      %p131 = scmp.eq.s32.totalorder %s20, 0
      %p132 = por %p130, %p131
      %p133 = scmp.ne.s32.totalorder %s125, %s127
      %p134 = scmp.eq.s32.totalorder %s25, 3
      %p135 = por %p133, %p134
      %p136 = scmp.ne.s32.totalorder %s127, %s128
      %p137 = scmp.eq.s32.totalorder %s25, 0
      %p138 = por %p136, %p137
      %p139 = scmp.ne.s32.totalorder %s127, %s128
      %p140 = scmp.eq.s32.totalorder %s26, 3
      %p141 = por %p139, %p140
      %p143 = scmp.ne.s32.totalorder %s128, %s142
      %p144 = scmp.eq.s32.totalorder %s26, 0
      %p145 = por %p143, %p144
      %s147 = sadd.s32 %s146, 1
      %p150 = scmp.eq.s32.totalorder %s20, 3
      %p151 = scmp.ne.s32.totalorder %s146, %s148
      %p152 = scmp.eq.s32.totalorder %s20, 0
      %p153 = por %p151, %p152
      %p154 = scmp.ne.s32.totalorder %s146, %s148
      %p155 = scmp.eq.s32.totalorder %s25, 3
      %p156 = por %p154, %p155
      %p157 = scmp.ne.s32.totalorder %s148, %s149
      %p158 = scmp.eq.s32.totalorder %s25, 0
      %p159 = por %p157, %p158
      %p160 = scmp.ne.s32.totalorder %s148, %s149
      %p161 = scmp.eq.s32.totalorder %s26, 3
      %p162 = por %p160, %p161
      %p164 = scmp.ne.s32.totalorder %s149, %s163
      %p165 = scmp.eq.s32.totalorder %s26, 0
      %p166 = por %p164, %p165
      %s168 = sadd.s32 %s167, 1
      %p171 = scmp.eq.s32.totalorder %s20, 3
      %p172 = scmp.ne.s32.totalorder %s167, %s169
      %p173 = scmp.eq.s32.totalorder %s20, 0
      %p174 = por %p172, %p173
      %p175 = scmp.ne.s32.totalorder %s167, %s169
      %p176 = scmp.eq.s32.totalorder %s25, 3
      %p177 = por %p175, %p176
      %p178 = scmp.ne.s32.totalorder %s169, %s170
      %p179 = scmp.eq.s32.totalorder %s25, 0
      %p180 = por %p178, %p179
      %p181 = scmp.ne.s32.totalorder %s169, %s170
      %p182 = scmp.eq.s32.totalorder %s26, 3
      %p183 = por %p181, %p182
      %p185 = scmp.ne.s32.totalorder %s170, %s184
      %p186 = scmp.eq.s32.totalorder %s26, 0
      %p187 = por %p185, %p186
      %s188 = ssub.s32 %s27, %s46
      %p189 = scmp.eq.s32.totalorder %s188, 0
      %s191 = sadd.s32 %s190, 1
      %s192 = scalar_select %p189, %s190, %s191
      %p195 = pneg %p189
      %p196 = scmp.eq.s32.totalorder %s20, 3
      %p197 = por %p195, %p196
      %p198 = scmp.ne.s32.totalorder %s190, %s193
      %p199 = scmp.eq.s32.totalorder %s20, 0
      %p200 = por %p198, %p199
      %p201 = scmp.ne.s32.totalorder %s190, %s193
      %p202 = scmp.eq.s32.totalorder %s25, 3
      %p203 = por %p201, %p202
      %p204 = scmp.ne.s32.totalorder %s193, %s194
      %p205 = scmp.eq.s32.totalorder %s25, 0
      %p206 = por %p204, %p205
      %p207 = scmp.ne.s32.totalorder %s193, %s194
      %p208 = scmp.eq.s32.totalorder %s26, 3
      %p209 = por %p207, %p208
      %p211 = scmp.ne.s32.totalorder %s194, %s210
      %p212 = scmp.eq.s32.totalorder %s26, 0
      %p213 = por %p211, %p212
      %s214 = ssub.s32 %s27, %s46
      %s215 = ssub.s32 %s28, %s42
      %s216 = sor.u32 %s214, %s215
      %s217 = ssub.s32 %s29, %s38
      %s218 = sor.u32 %s216, %s217
      %p219 = scmp.eq.s32.totalorder %s218, 0
      %s221 = sadd.s32 %s220, 1
      %s222 = scalar_select %p219, %s220, %s221
      %p225 = pneg %p219
      %p226 = scmp.eq.s32.totalorder %s20, 3
      %p227 = por %p225, %p226
      %p228 = scmp.ne.s32.totalorder %s220, %s223
      %p229 = scmp.eq.s32.totalorder %s20, 0
      %p230 = por %p228, %p229
      %p231 = scmp.ne.s32.totalorder %s220, %s223
      %p232 = scmp.eq.s32.totalorder %s25, 3
      %p233 = por %p231, %p232
      %p234 = scmp.ne.s32.totalorder %s223, %s224
      %p235 = scmp.eq.s32.totalorder %s25, 0
      %p236 = por %p234, %p235
      %p237 = scmp.ne.s32.totalorder %s223, %s224
      %p238 = scmp.eq.s32.totalorder %s26, 3
      %p239 = por %p237, %p238
      %p241 = scmp.ne.s32.totalorder %s224, %s240
      %p242 = scmp.eq.s32.totalorder %s26, 0
      %p243 = por %p241, %p242
      %p244 = scmp.le.s32.totalorder 1, %s20
      %p245 = scmp.lt.s32.totalorder %s20, 5
      %p246 = pnand %p244, %p245
      %p247 = pneg %p246
      // Predicated region
      $region9: #{tpu_custom_call.1} parent=5 // pred_check
        _
      $region10: #{tpu_custom_call.1} parent=5 // pred_check_branch
        %249 = sbr.rel (%p246) target = $region12
      $region11: #{tpu_custom_call.1} parent=5 // pred_region
        %s250 = ssub.s32 %s20, 1
        // Predicated region
        $region13: #{tpu_custom_call.1} parent=11 // pred_check
          %p251 = pneg %p138
        $region14: #{tpu_custom_call.1} parent=11 // pred_check_branch
          %253 = sbr.rel (%p251) target = $region16
        $region15: #{tpu_custom_call.1} parent=11 // pred_region
          _
        $region16: #{tpu_custom_call.1} parent=11 // pred_fallthru
          _
        // Predicated region
        $region17: #{tpu_custom_call.1} parent=11 // pred_check
          %p254 = pneg %p159
        $region18: #{tpu_custom_call.1} parent=11 // pred_check_branch
          %256 = sbr.rel (%p254) target = $region20
        $region19: #{tpu_custom_call.1} parent=11 // pred_region
          %258 = vsyncadd [#allocation7], 0
          %s259 = sshll.u32 %s4, 4
          %s260 = int_to_ptr.hbm [resolvable:$true] %s259
          %s261 = sshll.u32 [#allocation6], 4
          %s262 = int_to_ptr.vmem [resolvable:$true] %s261
          %267 = dma.hbm_to_vmem [thread:$0]  %s260, 4096, %s262, [#allocation7], 256, 256, 16
        $region20: #{tpu_custom_call.1} parent=11 // pred_fallthru
          _
        // Predicated region
        $region21: #{tpu_custom_call.1} parent=11 // pred_check
          %p268 = pneg %p180
        $region22: #{tpu_custom_call.1} parent=11 // pred_check_branch
          %270 = sbr.rel (%p268) target = $region24
        $region23: #{tpu_custom_call.1} parent=11 // pred_region
          %272 = vsyncadd [#allocation7], 0
          %s273 = sshll.u32 %s5, 4
          %s274 = int_to_ptr.hbm [resolvable:$true] %s273
          %s275 = sshll.u32 [#allocation8], 4
          %s276 = int_to_ptr.vmem [resolvable:$true] %s275
          %281 = dma.hbm_to_vmem [thread:$0]  %s274, 8192, %s276, [#allocation7], 256, 256, 16
        $region24: #{tpu_custom_call.1} parent=11 // pred_fallthru
          _
      $region12: #{tpu_custom_call.1} parent=5 // pred_fallthru
        _
      %p282 = scmp.lt.s32.totalorder %s20, 4
      // Predicated region
      $region25: #{tpu_custom_call.1} parent=5 // pred_check
        %p283 = pneg %p282
      $region26: #{tpu_custom_call.1} parent=5 // pred_check_branch
        %285 = sbr.rel (%p283) target = $region28
      $region27: #{tpu_custom_call.1} parent=5 // pred_region
        // Predicated region
        $region29: #{tpu_custom_call.1} parent=27 // pred_check
          %p286 = pneg %p59
        $region30: #{tpu_custom_call.1} parent=27 // pred_check_branch
          %288 = sbr.rel (%p286) target = $region32
        $region31: #{tpu_custom_call.1} parent=27 // pred_region
          %p289 = scmp.lt.s32.totalorder %s27, 1
          %s290 = scalar_select %p289, %s27, 1
          %s291 = smul.addr %s290, 16
          %s292 = smul.addr %s291, 8
          %s293 = scalar_lea.vmem %s0, %s292
        $region32: #{tpu_custom_call.1} parent=27 // pred_fallthru
          _
        // Predicated region
        $region33: #{tpu_custom_call.1} parent=27 // pred_check
          %p294 = pneg %p85
        $region34: #{tpu_custom_call.1} parent=27 // pred_check_branch
          %296 = sbr.rel (%p294) target = $region36
        $region35: #{tpu_custom_call.1} parent=27 // pred_region
          %s297 = sand.u32 %s75, 1
          %s298 = scalar_lea.sflag [#allocation4], %s297
          %s299 = sand.u32 %s75, 1
          %s300 = smul.addr %s299, 64
          %s301 = scalar_lea.vmem [#allocation3], %s300
          %303 = vsyncadd %s298, 0
          %s304 = smul.addr %s28, 8
          %s305 = smul.addr %s304, 8
          %s306 = scalar_lea.hbm %s1, %s305
          %s307 = sshll.u32 %s306, 4
          %s308 = int_to_ptr.hbm [resolvable:$true] %s307
          %s309 = sshll.u32 %s301, 4
          %s310 = int_to_ptr.vmem [resolvable:$true] %s309
          %315 = dma.hbm_to_vmem [thread:$0]  %s308, 1024, %s310, %s298, 256, 256, 16
        $region36: #{tpu_custom_call.1} parent=27 // pred_fallthru
          _
        // Predicated region
        $region37: #{tpu_custom_call.1} parent=27 // pred_check
          %p316 = pneg %p111
        $region38: #{tpu_custom_call.1} parent=27 // pred_check_branch
          %318 = sbr.rel (%p316) target = $region40
        $region39: #{tpu_custom_call.1} parent=27 // pred_region
          %p319 = scmp.lt.s32.totalorder %s28, 1
          %s320 = scalar_select %p319, %s28, 1
          %s321 = smul.addr %s320, 2
          %s322 = scalar_lea.vmem %s2, %s321
        $region40: #{tpu_custom_call.1} parent=27 // pred_fallthru
          _
        // Predicated region
        $region41: #{tpu_custom_call.1} parent=27 // pred_check
          %p323 = pneg %p200
        $region42: #{tpu_custom_call.1} parent=27 // pred_check_branch
          %325 = sbr.rel (%p323) target = $region44
        $region43: #{tpu_custom_call.1} parent=27 // pred_region
          %p326 = scmp.lt.s32.totalorder %s27, 1
          %s327 = scalar_select %p326, %s27, 1
          %s328 = smul.addr %s327, 2
          %s329 = scalar_lea.vmem %s6, %s328
        $region44: #{tpu_custom_call.1} parent=27 // pred_fallthru
          _
      $region28: #{tpu_custom_call.1} parent=5 // pred_fallthru
        _
      %p330 = scmp.le.s32.totalorder 1, %s20
      %p331 = scmp.lt.s32.totalorder %s20, 5
      %p332 = pnand %p330, %p331
      %p333 = pneg %p332
      // Predicated region
      $region45: #{tpu_custom_call.1} parent=5 // pred_check
        _
      $region46: #{tpu_custom_call.1} parent=5 // pred_check_branch
        %335 = sbr.rel (%p332) target = $region48
      $region47: #{tpu_custom_call.1} parent=5 // pred_region
        %s336 = ssub.s32 %s20, 1
        %s337 = sand.u32 %s78, 1
        %s338 = scalar_lea.sflag [#allocation4], %s337
        %s339 = sand.u32 %s78, 1
        %s340 = smul.addr %s339, 64
        %s341 = scalar_lea.vmem [#allocation3], %s340
        // Predicated region
        $region49: #{tpu_custom_call.1} parent=47 // pred_check
          %p342 = pneg %p91
        $region50: #{tpu_custom_call.1} parent=47 // pred_check_branch
          %344 = sbr.rel (%p342) target = $region52
        $region51: #{tpu_custom_call.1} parent=47 // pred_region
          %346 = dma.done %s338, 1024
        $region52: #{tpu_custom_call.1} parent=47 // pred_fallthru
          _
        // Predicated region
        $region53: #{tpu_custom_call.1} parent=47 // pred_check
          %p347 = pneg %p159
        $region54: #{tpu_custom_call.1} parent=47 // pred_check_branch
          %349 = sbr.rel (%p347) target = $region56
        $region55: #{tpu_custom_call.1} parent=47 // pred_region
          %351 = dma.done [#allocation7], 4096
        $region56: #{tpu_custom_call.1} parent=47 // pred_fallthru
          _
        // Predicated region
        $region57: #{tpu_custom_call.1} parent=47 // pred_check
          %p352 = pneg %p180
        $region58: #{tpu_custom_call.1} parent=47 // pred_check_branch
          %354 = sbr.rel (%p352) target = $region60
        $region59: #{tpu_custom_call.1} parent=47 // pred_region
          %356 = dma.done [#allocation7], 8192
        $region60: #{tpu_custom_call.1} parent=47 // pred_fallthru
          _
        %p357 = scmp.lt.s32.totalorder %s30, 1
        %s358 = scalar_select %p357, %s30, 1
        %s359 = smul.addr %s358, 16
        %s360 = smul.addr %s359, 8
        %s361 = scalar_lea.vmem %s0, %s360
        %p362 = pneg %p65
        %p363 = pneg %p62
        %s364 = sand.u32 %s78, 1
        %s365 = scalar_lea.sflag [#allocation4], %s364
        %s366 = sand.u32 %s78, 1
        %s367 = smul.addr %s366, 64
        %s368 = scalar_lea.vmem [#allocation3], %s367
        %p369 = pneg %p91
        %p370 = pneg %p88
        %p371 = scmp.lt.s32.totalorder %s31, 1
        %s372 = scalar_select %p371, %s31, 1
        %s373 = smul.addr %s372, 2
        %s374 = scalar_lea.vmem %s2, %s373
        %p375 = pneg %p117
        %p376 = pneg %p114
        %p377 = pneg %p138
        %p378 = pneg %p135
        %p379 = pneg %p159
        %p380 = pneg %p156
        %p381 = pneg %p180
        %p382 = pneg %p177
        %p383 = scmp.lt.s32.totalorder %s30, 1
        %s384 = scalar_select %p383, %s30, 1
        %s385 = smul.addr %s384, 2
        %s386 = scalar_lea.vmem %s6, %s385
        %p387 = pneg %p206
        %p388 = pneg %p203
        %p389 = pneg %p236
        %p390 = pneg %p233
        %s391 = sand.u32 %s223, 1
        %s392 = scalar_lea.sflag [#allocation5], %s391
        %s393 = sand.u32 %s223, 1
        %s394 = smul.addr %s393, 256
        %s395 = scalar_lea.vmem [#allocation9], %s394
        %p396 = scmp.lt.s32.totalorder %s30, 1
        %s397 = scalar_select %p396, %s30, 1
        %s398 = smul.addr %s397, 16
        %s399 = smul.addr %s398, 8
        %s400 = scalar_lea.vmem %s0, %s399
        %p401 = scmp.lt.s32.totalorder %s31, 1
        %s402 = scalar_select %p401, %s31, 1
        %s403 = smul.addr %s402, 2
        %s404 = scalar_lea.vmem %s2, %s403
        %p405 = scmp.lt.s32.totalorder %s30, 1
        %s406 = scalar_select %p405, %s30, 1
        %s407 = smul.addr %s406, 2
        %s408 = scalar_lea.vmem %s6, %s407
        %s409 = smul.u32 2, %s31
        %s410 = smul.u32 16, %s32
        %p411 = scmp.eq.s32.totalorder %s32, 0
        // Predicated region
        $region61: #{tpu_custom_call.1} parent=47 // pred_check
          %p412 = pneg %p411
        $region62: #{tpu_custom_call.1} parent=47 // pred_check_branch
          %414 = sbr.rel (%p412) target = $region64
        $region63: #{tpu_custom_call.1} parent=47 // pred_region
          %v415 = vld [vmem:[%s400] sm:$0xff]
          %v416 = vld [vmem:[%s400 + $0x8] sm:$0xff]
          %v417 = vld [vmem:[%s400 + $0x10] sm:$0xff]
          %v418 = vld [vmem:[%s400 + $0x18] sm:$0xff]
          %v419 = vld [vmem:[%s400 + $0x20] sm:$0xff]
          %v420 = vld [vmem:[%s400 + $0x28] sm:$0xff]
          %v421 = vld [vmem:[%s400 + $0x30] sm:$0xff]
          %v422 = vld [vmem:[%s400 + $0x38] sm:$0xff]
          %v423 = vld [vmem:[%s400 + $0x40] sm:$0xff]
          %v424 = vld [vmem:[%s400 + $0x48] sm:$0xff]
          %v425 = vld [vmem:[%s400 + $0x50] sm:$0xff]
          %v426 = vld [vmem:[%s400 + $0x58] sm:$0xff]
          %v427 = vld [vmem:[%s400 + $0x60] sm:$0xff]
          %v428 = vld [vmem:[%s400 + $0x68] sm:$0xff]
          %v429 = vld [vmem:[%s400 + $0x70] sm:$0xff]
          %v430 = vld [vmem:[%s400 + $0x78] sm:$0xff]
          %v431 = vld [vmem:[%s341] sm:$0xff]
          %v432 = vld [vmem:[%s341 + $0x8] sm:$0xff]
          %v433 = vld [vmem:[%s341 + $0x10] sm:$0xff]
          %v434 = vld [vmem:[%s341 + $0x18] sm:$0xff]
          %v435 = vld [vmem:[%s341 + $0x20] sm:$0xff]
          %v436 = vld [vmem:[%s341 + $0x28] sm:$0xff]
          %v437 = vld [vmem:[%s341 + $0x30] sm:$0xff]
          %v438 = vld [vmem:[%s341 + $0x38] sm:$0xff]
          %v439 = vld [vmem:[%s404] sm:$0x3]
          %v441 = vperm.slane %v439, 0
          %v442 = vperm.slane %v439, 1
          %vm445 = vcmask 261120
          %v447 = vsel %vm445, %v415, 0
          %v450 = vsel %vm445, %v416, 0
          %v453 = vsel %vm445, %v417, 0
          %v456 = vsel %vm445, %v418, 0
          %v459 = vsel %vm445, %v419, 0
          %v462 = vsel %vm445, %v420, 0
          %v465 = vsel %vm445, %v421, 0
          %v468 = vsel %vm445, %v422, 0
          %v471 = vsel %vm445, %v423, 0
          %v474 = vsel %vm445, %v424, 0
          %v477 = vsel %vm445, %v425, 0
          %v480 = vsel %vm445, %v426, 0
          %v483 = vsel %vm445, %v427, 0
          %v486 = vsel %vm445, %v428, 0
          %v489 = vsel %vm445, %v429, 0
          %v492 = vsel %vm445, %v430, 0
          %494 = vmatpush.msra.mxu0 0.0
          %495 = vmatpush.msra.mxu0 0.0
          %496 = vmatpush.msra.mxu0 0.0
          %497 = vmatpush.msra.mxu0 0.0
          %498 = vmatpush.msra.mxu0 0.0
          %499 = vmatpush.msra.mxu0 0.0
          %500 = vmatpush.msra.mxu0 0.0
          %501 = vmatpush.msra.mxu0 0.0
          %502 = vmatpush.msra.mxu0 0.0
          %503 = vmatpush.msra.mxu0 0.0
          %504 = vmatpush.msra.mxu0 0.0
          %505 = vmatpush.msra.mxu0 0.0
          %506 = vmatpush.msra.mxu0 %v437
          %507 = vmatpush.msra.mxu0 %v435
          %508 = vmatpush.msra.mxu0 %v433
          %509 = vmatpush.msra.mxu0 %v431
          %510 = vmatmul.f32.gmra.mxu0 %v447
          %v511 = vpop.f32.mrf.mxu0
          %v512 = vadd.f32 %v441, %v511
          %513 = vmatmul.f32.gmra.mxu0 %v450
          %v514 = vpop.f32.mrf.mxu0
          %v515 = vadd.f32 %v441, %v514
          %516 = vmatmul.f32.gmra.mxu0 %v453
          %v517 = vpop.f32.mrf.mxu0
          %v518 = vadd.f32 %v441, %v517
          %519 = vmatmul.f32.gmra.mxu0 %v456
          %v520 = vpop.f32.mrf.mxu0
          %v521 = vadd.f32 %v441, %v520
          %522 = vmatmul.f32.gmra.mxu0 %v459
          %v523 = vpop.f32.mrf.mxu0
          %v524 = vadd.f32 %v441, %v523
          %525 = vmatmul.f32.gmra.mxu0 %v462
          %v526 = vpop.f32.mrf.mxu0
          %v527 = vadd.f32 %v441, %v526
          %528 = vmatmul.f32.gmra.mxu0 %v465
          %v529 = vpop.f32.mrf.mxu0
          %v530 = vadd.f32 %v441, %v529
          %531 = vmatmul.f32.gmra.mxu0 %v468
          %v532 = vpop.f32.mrf.mxu0
          %v533 = vadd.f32 %v441, %v532
          %534 = vmatmul.f32.gmra.mxu0 %v471
          %v535 = vpop.f32.mrf.mxu0
          %v536 = vadd.f32 %v441, %v535
          %537 = vmatmul.f32.gmra.mxu0 %v474
          %v538 = vpop.f32.mrf.mxu0
          %v539 = vadd.f32 %v441, %v538
          %540 = vmatmul.f32.gmra.mxu0 %v477
          %v541 = vpop.f32.mrf.mxu0
          %v542 = vadd.f32 %v441, %v541
          %543 = vmatmul.f32.gmra.mxu0 %v480
          %v544 = vpop.f32.mrf.mxu0
          %v545 = vadd.f32 %v441, %v544
          %546 = vmatmul.f32.gmra.mxu0 %v483
          %v547 = vpop.f32.mrf.mxu0
          %v548 = vadd.f32 %v441, %v547
          %549 = vmatmul.f32.gmra.mxu0 %v486
          %v550 = vpop.f32.mrf.mxu0
          %v551 = vadd.f32 %v441, %v550
          %552 = vmatmul.f32.gmra.mxu0 %v489
          %v553 = vpop.f32.mrf.mxu0
          %v554 = vadd.f32 %v441, %v553
          %555 = vmatmul.f32.gmra.mxu0 %v492
          %v556 = vpop.f32.mrf.mxu0
          %v557 = vadd.f32 %v441, %v556
          %558 = vdwg.mxu0
          %559 = vmatpush.msra.mxu0 0.0
          %560 = vmatpush.msra.mxu0 0.0
          %561 = vmatpush.msra.mxu0 0.0
          %562 = vmatpush.msra.mxu0 0.0
          %563 = vmatpush.msra.mxu0 0.0
          %564 = vmatpush.msra.mxu0 0.0
          %565 = vmatpush.msra.mxu0 0.0
          %566 = vmatpush.msra.mxu0 0.0
          %567 = vmatpush.msra.mxu0 0.0
          %568 = vmatpush.msra.mxu0 0.0
          %569 = vmatpush.msra.mxu0 0.0
          %570 = vmatpush.msra.mxu0 0.0
          %571 = vmatpush.msra.mxu0 %v438
          %572 = vmatpush.msra.mxu0 %v436
          %573 = vmatpush.msra.mxu0 %v434
          %574 = vmatpush.msra.mxu0 %v432
          %575 = vmatmul.f32.gmra.mxu0 %v447
          %v576 = vpop.f32.mrf.mxu0
          %v577 = vadd.f32 %v442, %v576
          %578 = vmatmul.f32.gmra.mxu0 %v450
          %v579 = vpop.f32.mrf.mxu0
          %v580 = vadd.f32 %v442, %v579
          %581 = vmatmul.f32.gmra.mxu0 %v453
          %v582 = vpop.f32.mrf.mxu0
          %v583 = vadd.f32 %v442, %v582
          %584 = vmatmul.f32.gmra.mxu0 %v456
          %v585 = vpop.f32.mrf.mxu0
          %v586 = vadd.f32 %v442, %v585
          %587 = vmatmul.f32.gmra.mxu0 %v459
          %v588 = vpop.f32.mrf.mxu0
          %v589 = vadd.f32 %v442, %v588
          %590 = vmatmul.f32.gmra.mxu0 %v462
          %v591 = vpop.f32.mrf.mxu0
          %v592 = vadd.f32 %v442, %v591
          %593 = vmatmul.f32.gmra.mxu0 %v465
          %v594 = vpop.f32.mrf.mxu0
          %v595 = vadd.f32 %v442, %v594
          %596 = vmatmul.f32.gmra.mxu0 %v468
          %v597 = vpop.f32.mrf.mxu0
          %v598 = vadd.f32 %v442, %v597
          %599 = vmatmul.f32.gmra.mxu0 %v471
          %v600 = vpop.f32.mrf.mxu0
          %v601 = vadd.f32 %v442, %v600
          %602 = vmatmul.f32.gmra.mxu0 %v474
          %v603 = vpop.f32.mrf.mxu0
          %v604 = vadd.f32 %v442, %v603
          %605 = vmatmul.f32.gmra.mxu0 %v477
          %v606 = vpop.f32.mrf.mxu0
          %v607 = vadd.f32 %v442, %v606
          %608 = vmatmul.f32.gmra.mxu0 %v480
          %v609 = vpop.f32.mrf.mxu0
          %v610 = vadd.f32 %v442, %v609
          %611 = vmatmul.f32.gmra.mxu0 %v483
          %v612 = vpop.f32.mrf.mxu0
          %v613 = vadd.f32 %v442, %v612
          %614 = vmatmul.f32.gmra.mxu0 %v486
          %v615 = vpop.f32.mrf.mxu0
          %v616 = vadd.f32 %v442, %v615
          %617 = vmatmul.f32.gmra.mxu0 %v489
          %v618 = vpop.f32.mrf.mxu0
          %v619 = vadd.f32 %v442, %v618
          %620 = vmatmul.f32.gmra.mxu0 %v492
          %v621 = vpop.f32.mrf.mxu0
          %v622 = vadd.f32 %v442, %v621
          %623 = vdwg.mxu0
          %v624 = vld [vmem:[#allocation8] sm:$0xff]
          %v625 = vld [vmem:[#allocation8 + $0x8] sm:$0xff]
          %v626 = vld [vmem:[#allocation8 + $0x10] sm:$0xff]
          %v627 = vld [vmem:[#allocation8 + $0x18] sm:$0xff]
          %v628 = vld [vmem:[#allocation8 + $0x20] sm:$0xff]
          %v629 = vld [vmem:[#allocation8 + $0x28] sm:$0xff]
          %v630 = vld [vmem:[#allocation8 + $0x30] sm:$0xff]
          %v631 = vld [vmem:[#allocation8 + $0x38] sm:$0xff]
          %v632 = vld [vmem:[#allocation8 + $0x40] sm:$0xff]
          %v633 = vld [vmem:[#allocation8 + $0x48] sm:$0xff]
          %v634 = vld [vmem:[#allocation8 + $0x50] sm:$0xff]
          %v635 = vld [vmem:[#allocation8 + $0x58] sm:$0xff]
          %v636 = vld [vmem:[#allocation8 + $0x60] sm:$0xff]
          %v637 = vld [vmem:[#allocation8 + $0x68] sm:$0xff]
          %v638 = vld [vmem:[#allocation8 + $0x70] sm:$0xff]
          %v639 = vld [vmem:[#allocation8 + $0x78] sm:$0xff]
          %v640 = vld [vmem:[#allocation8 + $0x80] sm:$0xff]
          %v641 = vld [vmem:[#allocation8 + $0x88] sm:$0xff]
          %v642 = vld [vmem:[#allocation8 + $0x90] sm:$0xff]
          %v643 = vld [vmem:[#allocation8 + $0x98] sm:$0xff]
          %v644 = vld [vmem:[#allocation8 + $0xa0] sm:$0xff]
          %v645 = vld [vmem:[#allocation8 + $0xa8] sm:$0xff]
          %v646 = vld [vmem:[#allocation8 + $0xb0] sm:$0xff]
          %v647 = vld [vmem:[#allocation8 + $0xb8] sm:$0xff]
          %v648 = vld [vmem:[#allocation8 + $0xc0] sm:$0xff]
          %v649 = vld [vmem:[#allocation8 + $0xc8] sm:$0xff]
          %v650 = vld [vmem:[#allocation8 + $0xd0] sm:$0xff]
          %v651 = vld [vmem:[#allocation8 + $0xd8] sm:$0xff]
          %v652 = vld [vmem:[#allocation8 + $0xe0] sm:$0xff]
          %v653 = vld [vmem:[#allocation8 + $0xe8] sm:$0xff]
          %v654 = vld [vmem:[#allocation8 + $0xf0] sm:$0xff]
          %v655 = vld [vmem:[#allocation8 + $0xf8] sm:$0xff]
          %v656 = vld [vmem:[#allocation8 + $0x100] sm:$0xff]
          %v657 = vld [vmem:[#allocation8 + $0x108] sm:$0xff]
          %v658 = vld [vmem:[#allocation8 + $0x110] sm:$0xff]
          %v659 = vld [vmem:[#allocation8 + $0x118] sm:$0xff]
          %v660 = vld [vmem:[#allocation8 + $0x120] sm:$0xff]
          %v661 = vld [vmem:[#allocation8 + $0x128] sm:$0xff]
          %v662 = vld [vmem:[#allocation8 + $0x130] sm:$0xff]
          %v663 = vld [vmem:[#allocation8 + $0x138] sm:$0xff]
          %v664 = vld [vmem:[#allocation8 + $0x140] sm:$0xff]
          %v665 = vld [vmem:[#allocation8 + $0x148] sm:$0xff]
          %v666 = vld [vmem:[#allocation8 + $0x150] sm:$0xff]
          %v667 = vld [vmem:[#allocation8 + $0x158] sm:$0xff]
          %v668 = vld [vmem:[#allocation8 + $0x160] sm:$0xff]
          %v669 = vld [vmem:[#allocation8 + $0x168] sm:$0xff]
          %v670 = vld [vmem:[#allocation8 + $0x170] sm:$0xff]
          %v671 = vld [vmem:[#allocation8 + $0x178] sm:$0xff]
          %v672 = vld [vmem:[#allocation8 + $0x180] sm:$0xff]
          %v673 = vld [vmem:[#allocation8 + $0x188] sm:$0xff]
          %v674 = vld [vmem:[#allocation8 + $0x190] sm:$0xff]
          %v675 = vld [vmem:[#allocation8 + $0x198] sm:$0xff]
          %v676 = vld [vmem:[#allocation8 + $0x1a0] sm:$0xff]
          %v677 = vld [vmem:[#allocation8 + $0x1a8] sm:$0xff]
          %v678 = vld [vmem:[#allocation8 + $0x1b0] sm:$0xff]
          %v679 = vld [vmem:[#allocation8 + $0x1b8] sm:$0xff]
          %v680 = vld [vmem:[#allocation8 + $0x1c0] sm:$0xff]
          %v681 = vld [vmem:[#allocation8 + $0x1c8] sm:$0xff]
          %v682 = vld [vmem:[#allocation8 + $0x1d0] sm:$0xff]
          %v683 = vld [vmem:[#allocation8 + $0x1d8] sm:$0xff]
          %v684 = vld [vmem:[#allocation8 + $0x1e0] sm:$0xff]
          %v685 = vld [vmem:[#allocation8 + $0x1e8] sm:$0xff]
          %v686 = vld [vmem:[#allocation8 + $0x1f0] sm:$0xff]
          %v687 = vld [vmem:[#allocation8 + $0x1f8] sm:$0xff]
          %688 = vmatpush.msra.mxu0 %v654
          %689 = vmatpush.msra.mxu0 %v652
          %690 = vmatpush.msra.mxu0 %v650
          %691 = vmatpush.msra.mxu0 %v648
          %692 = vmatpush.msra.mxu0 %v646
          %693 = vmatpush.msra.mxu0 %v644
          %694 = vmatpush.msra.mxu0 %v642
          %695 = vmatpush.msra.mxu0 %v640
          %696 = vmatpush.msra.mxu0 %v638
          %697 = vmatpush.msra.mxu0 %v636
          %698 = vmatpush.msra.mxu0 %v634
          %699 = vmatpush.msra.mxu0 %v632
          %700 = vmatpush.msra.mxu0 %v630
          %701 = vmatpush.msra.mxu0 %v628
          %702 = vmatpush.msra.mxu0 %v626
          %703 = vmatpush.msra.mxu0 %v624
          %704 = vmatmul.f32.gmra.mxu0 %v512
          %v705 = vpop.f32.mrf.mxu0
          %v706 = vadd.f32 0.0, %v705
          %707 = vmatmul.f32.gmra.mxu0 %v515
          %v708 = vpop.f32.mrf.mxu0
          %v709 = vadd.f32 0.0, %v708
          %710 = vmatmul.f32.gmra.mxu0 %v518
          %v711 = vpop.f32.mrf.mxu0
          %v712 = vadd.f32 0.0, %v711
          %713 = vmatmul.f32.gmra.mxu0 %v521
          %v714 = vpop.f32.mrf.mxu0
          %v715 = vadd.f32 0.0, %v714
          %716 = vmatmul.f32.gmra.mxu0 %v524
          %v717 = vpop.f32.mrf.mxu0
          %v718 = vadd.f32 0.0, %v717
          %719 = vmatmul.f32.gmra.mxu0 %v527
          %v720 = vpop.f32.mrf.mxu0
          %v721 = vadd.f32 0.0, %v720
          %722 = vmatmul.f32.gmra.mxu0 %v530
          %v723 = vpop.f32.mrf.mxu0
          %v724 = vadd.f32 0.0, %v723
          %725 = vmatmul.f32.gmra.mxu0 %v533
          %v726 = vpop.f32.mrf.mxu0
          %v727 = vadd.f32 0.0, %v726
          %728 = vmatmul.f32.gmra.mxu0 %v536
          %v729 = vpop.f32.mrf.mxu0
          %v730 = vadd.f32 0.0, %v729
          %731 = vmatmul.f32.gmra.mxu0 %v539
          %v732 = vpop.f32.mrf.mxu0
          %v733 = vadd.f32 0.0, %v732
          %734 = vmatmul.f32.gmra.mxu0 %v542
          %v735 = vpop.f32.mrf.mxu0
          %v736 = vadd.f32 0.0, %v735
          %737 = vmatmul.f32.gmra.mxu0 %v545
          %v738 = vpop.f32.mrf.mxu0
          %v739 = vadd.f32 0.0, %v738
          %740 = vmatmul.f32.gmra.mxu0 %v548
          %v741 = vpop.f32.mrf.mxu0
          %v742 = vadd.f32 0.0, %v741
          %743 = vmatmul.f32.gmra.mxu0 %v551
          %v744 = vpop.f32.mrf.mxu0
          %v745 = vadd.f32 0.0, %v744
          %746 = vmatmul.f32.gmra.mxu0 %v554
          %v747 = vpop.f32.mrf.mxu0
          %v748 = vadd.f32 0.0, %v747
          %749 = vmatmul.f32.gmra.mxu0 %v557
          %v750 = vpop.f32.mrf.mxu0
          %v751 = vadd.f32 0.0, %v750
          %752 = vdwg.mxu0
          %753 = vmatpush.msra.mxu0 %v686
          %754 = vmatpush.msra.mxu0 %v684
          %755 = vmatpush.msra.mxu0 %v682
          %756 = vmatpush.msra.mxu0 %v680
          %757 = vmatpush.msra.mxu0 %v678
          %758 = vmatpush.msra.mxu0 %v676
          %759 = vmatpush.msra.mxu0 %v674
          %760 = vmatpush.msra.mxu0 %v672
          %761 = vmatpush.msra.mxu0 %v670
          %762 = vmatpush.msra.mxu0 %v668
          %763 = vmatpush.msra.mxu0 %v666
          %764 = vmatpush.msra.mxu0 %v664
          %765 = vmatpush.msra.mxu0 %v662
          %766 = vmatpush.msra.mxu0 %v660
          %767 = vmatpush.msra.mxu0 %v658
          %768 = vmatpush.msra.mxu0 %v656
          %769 = vmatmul.f32.gmra.mxu0 %v577
          %v770 = vpop.f32.mrf.mxu0
          %v771 = vadd.f32 %v706, %v770
          %772 = vmatmul.f32.gmra.mxu0 %v580
          %v773 = vpop.f32.mrf.mxu0
          %v774 = vadd.f32 %v709, %v773
          %775 = vmatmul.f32.gmra.mxu0 %v583
          %v776 = vpop.f32.mrf.mxu0
          %v777 = vadd.f32 %v712, %v776
          %778 = vmatmul.f32.gmra.mxu0 %v586
          %v779 = vpop.f32.mrf.mxu0
          %v780 = vadd.f32 %v715, %v779
          %781 = vmatmul.f32.gmra.mxu0 %v589
          %v782 = vpop.f32.mrf.mxu0
          %v783 = vadd.f32 %v718, %v782
          %784 = vmatmul.f32.gmra.mxu0 %v592
          %v785 = vpop.f32.mrf.mxu0
          %v786 = vadd.f32 %v721, %v785
          %787 = vmatmul.f32.gmra.mxu0 %v595
          %v788 = vpop.f32.mrf.mxu0
          %v789 = vadd.f32 %v724, %v788
          %790 = vmatmul.f32.gmra.mxu0 %v598
          %v791 = vpop.f32.mrf.mxu0
          %v792 = vadd.f32 %v727, %v791
          %793 = vmatmul.f32.gmra.mxu0 %v601
          %v794 = vpop.f32.mrf.mxu0
          %v795 = vadd.f32 %v730, %v794
          %796 = vmatmul.f32.gmra.mxu0 %v604
          %v797 = vpop.f32.mrf.mxu0
          %v798 = vadd.f32 %v733, %v797
          %799 = vmatmul.f32.gmra.mxu0 %v607
          %v800 = vpop.f32.mrf.mxu0
          %v801 = vadd.f32 %v736, %v800
          %802 = vmatmul.f32.gmra.mxu0 %v610
          %v803 = vpop.f32.mrf.mxu0
          %v804 = vadd.f32 %v739, %v803
          %805 = vmatmul.f32.gmra.mxu0 %v613
          %v806 = vpop.f32.mrf.mxu0
          %v807 = vadd.f32 %v742, %v806
          %808 = vmatmul.f32.gmra.mxu0 %v616
          %v809 = vpop.f32.mrf.mxu0
          %v810 = vadd.f32 %v745, %v809
          %811 = vmatmul.f32.gmra.mxu0 %v619
          %v812 = vpop.f32.mrf.mxu0
          %v813 = vadd.f32 %v748, %v812
          %814 = vmatmul.f32.gmra.mxu0 %v622
          %v815 = vpop.f32.mrf.mxu0
          %v816 = vadd.f32 %v751, %v815
          %817 = vdwg.mxu0
          %818 = vmatpush.msra.mxu0 %v655
          %819 = vmatpush.msra.mxu0 %v653
          %820 = vmatpush.msra.mxu0 %v651
          %821 = vmatpush.msra.mxu0 %v649
          %822 = vmatpush.msra.mxu0 %v647
          %823 = vmatpush.msra.mxu0 %v645
          %824 = vmatpush.msra.mxu0 %v643
          %825 = vmatpush.msra.mxu0 %v641
          %826 = vmatpush.msra.mxu0 %v639
          %827 = vmatpush.msra.mxu0 %v637
          %828 = vmatpush.msra.mxu0 %v635
          %829 = vmatpush.msra.mxu0 %v633
          %830 = vmatpush.msra.mxu0 %v631
          %831 = vmatpush.msra.mxu0 %v629
          %832 = vmatpush.msra.mxu0 %v627
          %833 = vmatpush.msra.mxu0 %v625
          %834 = vmatmul.f32.gmra.mxu0 %v512
          %v835 = vpop.f32.mrf.mxu0
          %v836 = vadd.f32 0.0, %v835
          %837 = vmatmul.f32.gmra.mxu0 %v515
          %v838 = vpop.f32.mrf.mxu0
          %v839 = vadd.f32 0.0, %v838
          %840 = vmatmul.f32.gmra.mxu0 %v518
          %v841 = vpop.f32.mrf.mxu0
          %v842 = vadd.f32 0.0, %v841
          %843 = vmatmul.f32.gmra.mxu0 %v521
          %v844 = vpop.f32.mrf.mxu0
          %v845 = vadd.f32 0.0, %v844
          %846 = vmatmul.f32.gmra.mxu0 %v524
          %v847 = vpop.f32.mrf.mxu0
          %v848 = vadd.f32 0.0, %v847
          %849 = vmatmul.f32.gmra.mxu0 %v527
          %v850 = vpop.f32.mrf.mxu0
          %v851 = vadd.f32 0.0, %v850
          %852 = vmatmul.f32.gmra.mxu0 %v530
          %v853 = vpop.f32.mrf.mxu0
          %v854 = vadd.f32 0.0, %v853
          %855 = vmatmul.f32.gmra.mxu0 %v533
          %v856 = vpop.f32.mrf.mxu0
          %v857 = vadd.f32 0.0, %v856
          %858 = vmatmul.f32.gmra.mxu0 %v536
          %v859 = vpop.f32.mrf.mxu0
          %v860 = vadd.f32 0.0, %v859
          %861 = vmatmul.f32.gmra.mxu0 %v539
          %v862 = vpop.f32.mrf.mxu0
          %v863 = vadd.f32 0.0, %v862
          %864 = vmatmul.f32.gmra.mxu0 %v542
          %v865 = vpop.f32.mrf.mxu0
          %v866 = vadd.f32 0.0, %v865
          %867 = vmatmul.f32.gmra.mxu0 %v545
          %v868 = vpop.f32.mrf.mxu0
          %v869 = vadd.f32 0.0, %v868
          %870 = vmatmul.f32.gmra.mxu0 %v548
          %v871 = vpop.f32.mrf.mxu0
          %v872 = vadd.f32 0.0, %v871
          %873 = vmatmul.f32.gmra.mxu0 %v551
          %v874 = vpop.f32.mrf.mxu0
          %v875 = vadd.f32 0.0, %v874
          %876 = vmatmul.f32.gmra.mxu0 %v554
          %v877 = vpop.f32.mrf.mxu0
          %v878 = vadd.f32 0.0, %v877
          %879 = vmatmul.f32.gmra.mxu0 %v557
          %v880 = vpop.f32.mrf.mxu0
          %v881 = vadd.f32 0.0, %v880
          %882 = vdwg.mxu0
          %883 = vmatpush.msra.mxu0 %v687
          %884 = vmatpush.msra.mxu0 %v685
          %885 = vmatpush.msra.mxu0 %v683
          %886 = vmatpush.msra.mxu0 %v681
          %887 = vmatpush.msra.mxu0 %v679
          %888 = vmatpush.msra.mxu0 %v677
          %889 = vmatpush.msra.mxu0 %v675
          %890 = vmatpush.msra.mxu0 %v673
          %891 = vmatpush.msra.mxu0 %v671
          %892 = vmatpush.msra.mxu0 %v669
          %893 = vmatpush.msra.mxu0 %v667
          %894 = vmatpush.msra.mxu0 %v665
          %895 = vmatpush.msra.mxu0 %v663
          %896 = vmatpush.msra.mxu0 %v661
          %897 = vmatpush.msra.mxu0 %v659
          %898 = vmatpush.msra.mxu0 %v657
          %899 = vmatmul.f32.gmra.mxu0 %v577
          %v900 = vpop.f32.mrf.mxu0
          %v901 = vadd.f32 %v836, %v900
          %902 = vmatmul.f32.gmra.mxu0 %v580
          %v903 = vpop.f32.mrf.mxu0
          %v904 = vadd.f32 %v839, %v903
          %905 = vmatmul.f32.gmra.mxu0 %v583
          %v906 = vpop.f32.mrf.mxu0
          %v907 = vadd.f32 %v842, %v906
          %908 = vmatmul.f32.gmra.mxu0 %v586
          %v909 = vpop.f32.mrf.mxu0
          %v910 = vadd.f32 %v845, %v909
          %911 = vmatmul.f32.gmra.mxu0 %v589
          %v912 = vpop.f32.mrf.mxu0
          %v913 = vadd.f32 %v848, %v912
          %914 = vmatmul.f32.gmra.mxu0 %v592
          %v915 = vpop.f32.mrf.mxu0
          %v916 = vadd.f32 %v851, %v915
          %917 = vmatmul.f32.gmra.mxu0 %v595
          %v918 = vpop.f32.mrf.mxu0
          %v919 = vadd.f32 %v854, %v918
          %920 = vmatmul.f32.gmra.mxu0 %v598
          %v921 = vpop.f32.mrf.mxu0
          %v922 = vadd.f32 %v857, %v921
          %923 = vmatmul.f32.gmra.mxu0 %v601
          %v924 = vpop.f32.mrf.mxu0
          %v925 = vadd.f32 %v860, %v924
          %926 = vmatmul.f32.gmra.mxu0 %v604
          %v927 = vpop.f32.mrf.mxu0
          %v928 = vadd.f32 %v863, %v927
          %929 = vmatmul.f32.gmra.mxu0 %v607
          %v930 = vpop.f32.mrf.mxu0
          %v931 = vadd.f32 %v866, %v930
          %932 = vmatmul.f32.gmra.mxu0 %v610
          %v933 = vpop.f32.mrf.mxu0
          %v934 = vadd.f32 %v869, %v933
          %935 = vmatmul.f32.gmra.mxu0 %v613
          %v936 = vpop.f32.mrf.mxu0
          %v937 = vadd.f32 %v872, %v936
          %938 = vmatmul.f32.gmra.mxu0 %v616
          %v939 = vpop.f32.mrf.mxu0
          %v940 = vadd.f32 %v875, %v939
          %941 = vmatmul.f32.gmra.mxu0 %v619
          %v942 = vpop.f32.mrf.mxu0
          %v943 = vadd.f32 %v878, %v942
          %944 = vmatmul.f32.gmra.mxu0 %v622
          %v945 = vpop.f32.mrf.mxu0
          %v946 = vadd.f32 %v881, %v945
          %947 = vdwg.mxu0
          %v948 = vld [vmem:[%s3] sm:$0xff]
          %v949 = vld [vmem:[%s3 + $0x8] sm:$0xff]
          %v950 = vld [vmem:[%s3 + $0x10] sm:$0xff]
          %v951 = vld [vmem:[%s3 + $0x18] sm:$0xff]
          %v952 = vld [vmem:[%s3 + $0x20] sm:$0xff]
          %v953 = vld [vmem:[%s3 + $0x28] sm:$0xff]
          %v954 = vld [vmem:[%s3 + $0x30] sm:$0xff]
          %v955 = vld [vmem:[%s3 + $0x38] sm:$0xff]
          %v956 = vld [vmem:[%s3 + $0x40] sm:$0xff]
          %v957 = vld [vmem:[%s3 + $0x48] sm:$0xff]
          %v958 = vld [vmem:[%s3 + $0x50] sm:$0xff]
          %v959 = vld [vmem:[%s3 + $0x58] sm:$0xff]
          %v960 = vld [vmem:[%s3 + $0x60] sm:$0xff]
          %v961 = vld [vmem:[%s3 + $0x68] sm:$0xff]
          %v962 = vld [vmem:[%s3 + $0x70] sm:$0xff]
          %v963 = vld [vmem:[%s3 + $0x78] sm:$0xff]
          %v964 = vld [vmem:[%s3 + $0x80] sm:$0xff]
          %v965 = vld [vmem:[%s3 + $0x88] sm:$0xff]
          %v966 = vld [vmem:[%s3 + $0x90] sm:$0xff]
          %v967 = vld [vmem:[%s3 + $0x98] sm:$0xff]
          %v968 = vld [vmem:[%s3 + $0xa0] sm:$0xff]
          %v969 = vld [vmem:[%s3 + $0xa8] sm:$0xff]
          %v970 = vld [vmem:[%s3 + $0xb0] sm:$0xff]
          %v971 = vld [vmem:[%s3 + $0xb8] sm:$0xff]
          %v972 = vld [vmem:[%s3 + $0xc0] sm:$0xff]
          %v973 = vld [vmem:[%s3 + $0xc8] sm:$0xff]
          %v974 = vld [vmem:[%s3 + $0xd0] sm:$0xff]
          %v975 = vld [vmem:[%s3 + $0xd8] sm:$0xff]
          %v976 = vld [vmem:[%s3 + $0xe0] sm:$0xff]
          %v977 = vld [vmem:[%s3 + $0xe8] sm:$0xff]
          %v978 = vld [vmem:[%s3 + $0xf0] sm:$0xff]
          %v979 = vld [vmem:[%s3 + $0xf8] sm:$0xff]
          %v980 = vmul.f32 %v512, %v948
          %v981 = vmul.f32 %v577, %v949
          %v982 = vmul.f32 %v515, %v950
          %v983 = vmul.f32 %v580, %v951
          %v984 = vmul.f32 %v518, %v952
          %v985 = vmul.f32 %v583, %v953
          %v986 = vmul.f32 %v521, %v954
          %v987 = vmul.f32 %v586, %v955
          %v988 = vmul.f32 %v524, %v956
          %v989 = vmul.f32 %v589, %v957
          %v990 = vmul.f32 %v527, %v958
          %v991 = vmul.f32 %v592, %v959
          %v992 = vmul.f32 %v530, %v960
          %v993 = vmul.f32 %v595, %v961
          %v994 = vmul.f32 %v533, %v962
          %v995 = vmul.f32 %v598, %v963
          %v996 = vmul.f32 %v536, %v964
          %v997 = vmul.f32 %v601, %v965
          %v998 = vmul.f32 %v539, %v966
          %v999 = vmul.f32 %v604, %v967
          %v1000 = vmul.f32 %v542, %v968
          %v1001 = vmul.f32 %v607, %v969
          %v1002 = vmul.f32 %v545, %v970
          %v1003 = vmul.f32 %v610, %v971
          %v1004 = vmul.f32 %v548, %v972
          %v1005 = vmul.f32 %v613, %v973
          %v1006 = vmul.f32 %v551, %v974
          %v1007 = vmul.f32 %v616, %v975
          %v1008 = vmul.f32 %v554, %v976
          %v1009 = vmul.f32 %v619, %v977
          %v1010 = vmul.f32 %v557, %v978
          %v1011 = vmul.f32 %v622, %v979
          %v1012 = vld [vmem:[#allocation6] sm:$0xff]
          %v1013 = vld [vmem:[#allocation6 + $0x8] sm:$0xff]
          %v1014 = vld [vmem:[#allocation6 + $0x10] sm:$0xff]
          %v1015 = vld [vmem:[#allocation6 + $0x18] sm:$0xff]
          %v1016 = vld [vmem:[#allocation6 + $0x20] sm:$0xff]
          %v1017 = vld [vmem:[#allocation6 + $0x28] sm:$0xff]
          %v1018 = vld [vmem:[#allocation6 + $0x30] sm:$0xff]
          %v1019 = vld [vmem:[#allocation6 + $0x38] sm:$0xff]
          %v1020 = vld [vmem:[#allocation6 + $0x40] sm:$0xff]
          %v1021 = vld [vmem:[#allocation6 + $0x48] sm:$0xff]
          %v1022 = vld [vmem:[#allocation6 + $0x50] sm:$0xff]
          %v1023 = vld [vmem:[#allocation6 + $0x58] sm:$0xff]
          %v1024 = vld [vmem:[#allocation6 + $0x60] sm:$0xff]
          %v1025 = vld [vmem:[#allocation6 + $0x68] sm:$0xff]
          %v1026 = vld [vmem:[#allocation6 + $0x70] sm:$0xff]
          %v1027 = vld [vmem:[#allocation6 + $0x78] sm:$0xff]
          %v1028 = vld [vmem:[#allocation6 + $0x80] sm:$0xff]
          %v1029 = vld [vmem:[#allocation6 + $0x88] sm:$0xff]
          %v1030 = vld [vmem:[#allocation6 + $0x90] sm:$0xff]
          %v1031 = vld [vmem:[#allocation6 + $0x98] sm:$0xff]
          %v1032 = vld [vmem:[#allocation6 + $0xa0] sm:$0xff]
          %v1033 = vld [vmem:[#allocation6 + $0xa8] sm:$0xff]
          %v1034 = vld [vmem:[#allocation6 + $0xb0] sm:$0xff]
          %v1035 = vld [vmem:[#allocation6 + $0xb8] sm:$0xff]
          %v1036 = vld [vmem:[#allocation6 + $0xc0] sm:$0xff]
          %v1037 = vld [vmem:[#allocation6 + $0xc8] sm:$0xff]
          %v1038 = vld [vmem:[#allocation6 + $0xd0] sm:$0xff]
          %v1039 = vld [vmem:[#allocation6 + $0xd8] sm:$0xff]
          %v1040 = vld [vmem:[#allocation6 + $0xe0] sm:$0xff]
          %v1041 = vld [vmem:[#allocation6 + $0xe8] sm:$0xff]
          %v1042 = vld [vmem:[#allocation6 + $0xf0] sm:$0xff]
          %v1043 = vld [vmem:[#allocation6 + $0xf8] sm:$0xff]
          %v1044 = vmul.f32 %v771, %v1012
          %v1045 = vmul.f32 %v901, %v1013
          %v1046 = vmul.f32 %v774, %v1014
          %v1047 = vmul.f32 %v904, %v1015
          %v1048 = vmul.f32 %v777, %v1016
          %v1049 = vmul.f32 %v907, %v1017
          %v1050 = vmul.f32 %v780, %v1018
          %v1051 = vmul.f32 %v910, %v1019
          %v1052 = vmul.f32 %v783, %v1020
          %v1053 = vmul.f32 %v913, %v1021
          %v1054 = vmul.f32 %v786, %v1022
          %v1055 = vmul.f32 %v916, %v1023
          %v1056 = vmul.f32 %v789, %v1024
          %v1057 = vmul.f32 %v919, %v1025
          %v1058 = vmul.f32 %v792, %v1026
          %v1059 = vmul.f32 %v922, %v1027
          %v1060 = vmul.f32 %v795, %v1028
          %v1061 = vmul.f32 %v925, %v1029
          %v1062 = vmul.f32 %v798, %v1030
          %v1063 = vmul.f32 %v928, %v1031
          %v1064 = vmul.f32 %v801, %v1032
          %v1065 = vmul.f32 %v931, %v1033
          %v1066 = vmul.f32 %v804, %v1034
          %v1067 = vmul.f32 %v934, %v1035
          %v1068 = vmul.f32 %v807, %v1036
          %v1069 = vmul.f32 %v937, %v1037
          %v1070 = vmul.f32 %v810, %v1038
          %v1071 = vmul.f32 %v940, %v1039
          %v1072 = vmul.f32 %v813, %v1040
          %v1073 = vmul.f32 %v943, %v1041
          %v1074 = vmul.f32 %v816, %v1042
          %v1075 = vmul.f32 %v946, %v1043
          %v1076 = vadd.f32 %v980, %v1044
          %v1077 = vadd.f32 %v981, %v1045
          %v1078 = vadd.f32 %v982, %v1046
          %v1079 = vadd.f32 %v983, %v1047
          %v1080 = vadd.f32 %v984, %v1048
          %v1081 = vadd.f32 %v985, %v1049
          %v1082 = vadd.f32 %v986, %v1050
          %v1083 = vadd.f32 %v987, %v1051
          %v1084 = vadd.f32 %v988, %v1052
          %v1085 = vadd.f32 %v989, %v1053
          %v1086 = vadd.f32 %v990, %v1054
          %v1087 = vadd.f32 %v991, %v1055
          %v1088 = vadd.f32 %v992, %v1056
          %v1089 = vadd.f32 %v993, %v1057
          %v1090 = vadd.f32 %v994, %v1058
          %v1091 = vadd.f32 %v995, %v1059
          %v1092 = vadd.f32 %v996, %v1060
          %v1093 = vadd.f32 %v997, %v1061
          %v1094 = vadd.f32 %v998, %v1062
          %v1095 = vadd.f32 %v999, %v1063
          %v1096 = vadd.f32 %v1000, %v1064
          %v1097 = vadd.f32 %v1001, %v1065
          %v1098 = vadd.f32 %v1002, %v1066
          %v1099 = vadd.f32 %v1003, %v1067
          %v1100 = vadd.f32 %v1004, %v1068
          %v1101 = vadd.f32 %v1005, %v1069
          %v1102 = vadd.f32 %v1006, %v1070
          %v1103 = vadd.f32 %v1007, %v1071
          %v1104 = vadd.f32 %v1008, %v1072
          %v1105 = vadd.f32 %v1009, %v1073
          %v1106 = vadd.f32 %v1010, %v1074
          %v1107 = vadd.f32 %v1011, %v1075
          %1108 = vst [vmem:[#allocation2] sm:$0xff] %v1076
          %1109 = vst [vmem:[#allocation2 + $0x8] sm:$0xff] %v1077
          %1110 = vst [vmem:[#allocation2 + $0x10] sm:$0xff] %v1078
          %1111 = vst [vmem:[#allocation2 + $0x18] sm:$0xff] %v1079
          %1112 = vst [vmem:[#allocation2 + $0x20] sm:$0xff] %v1080
          %1113 = vst [vmem:[#allocation2 + $0x28] sm:$0xff] %v1081
          %1114 = vst [vmem:[#allocation2 + $0x30] sm:$0xff] %v1082
          %1115 = vst [vmem:[#allocation2 + $0x38] sm:$0xff] %v1083
          %1116 = vst [vmem:[#allocation2 + $0x40] sm:$0xff] %v1084
          %1117 = vst [vmem:[#allocation2 + $0x48] sm:$0xff] %v1085
          %1118 = vst [vmem:[#allocation2 + $0x50] sm:$0xff] %v1086
          %1119 = vst [vmem:[#allocation2 + $0x58] sm:$0xff] %v1087
          %1120 = vst [vmem:[#allocation2 + $0x60] sm:$0xff] %v1088
          %1121 = vst [vmem:[#allocation2 + $0x68] sm:$0xff] %v1089
          %1122 = vst [vmem:[#allocation2 + $0x70] sm:$0xff] %v1090
          %1123 = vst [vmem:[#allocation2 + $0x78] sm:$0xff] %v1091
          %1124 = vst [vmem:[#allocation2 + $0x80] sm:$0xff] %v1092
          %1125 = vst [vmem:[#allocation2 + $0x88] sm:$0xff] %v1093
          %1126 = vst [vmem:[#allocation2 + $0x90] sm:$0xff] %v1094
          %1127 = vst [vmem:[#allocation2 + $0x98] sm:$0xff] %v1095
          %1128 = vst [vmem:[#allocation2 + $0xa0] sm:$0xff] %v1096
          %1129 = vst [vmem:[#allocation2 + $0xa8] sm:$0xff] %v1097
          %1130 = vst [vmem:[#allocation2 + $0xb0] sm:$0xff] %v1098
          %1131 = vst [vmem:[#allocation2 + $0xb8] sm:$0xff] %v1099
          %1132 = vst [vmem:[#allocation2 + $0xc0] sm:$0xff] %v1100
          %1133 = vst [vmem:[#allocation2 + $0xc8] sm:$0xff] %v1101
          %1134 = vst [vmem:[#allocation2 + $0xd0] sm:$0xff] %v1102
          %1135 = vst [vmem:[#allocation2 + $0xd8] sm:$0xff] %v1103
          %1136 = vst [vmem:[#allocation2 + $0xe0] sm:$0xff] %v1104
          %1137 = vst [vmem:[#allocation2 + $0xe8] sm:$0xff] %v1105
          %1138 = vst [vmem:[#allocation2 + $0xf0] sm:$0xff] %v1106
          %1139 = vst [vmem:[#allocation2 + $0xf8] sm:$0xff] %v1107
        $region64: #{tpu_custom_call.1} parent=47 // pred_fallthru
          _
        %s1140 = smul.u32 %s32, 128
        %v1141 = vld [vmem:[%s408] sm:$0x3]
        %v1142 = vlaneseq
        %v1143 = vshrl.u32 %v1142, 7
        %v1144 = vadd.s32 %v1143, 8
        %v1145 = vadd.s32 %v1143, 16
        %v1146 = vadd.s32 %v1143, 24
        %v1147 = vadd.s32 %v1143, 32
        %v1148 = vadd.s32 %v1143, 40
        %v1149 = vadd.s32 %v1143, 48
        %v1150 = vadd.s32 %v1143, 56
        %v1151 = vadd.s32 %v1143, 64
        %v1152 = vadd.s32 %v1143, 72
        %v1153 = vadd.s32 %v1143, 80
        %v1154 = vadd.s32 %v1143, 88
        %v1155 = vadd.s32 %v1143, 96
        %v1156 = vadd.s32 %v1143, 104
        %v1157 = vadd.s32 %v1143, 112
        %v1158 = vadd.s32 %v1143, 120
        %v1159 = vstv %s1140
        %v1160 = vadd.s32 %v1159, %v1143
        %v1161 = vadd.s32 %v1159, %v1144
        %v1162 = vadd.s32 %v1159, %v1145
        %v1163 = vadd.s32 %v1159, %v1146
        %v1164 = vadd.s32 %v1159, %v1147
        %v1165 = vadd.s32 %v1159, %v1148
        %v1166 = vadd.s32 %v1159, %v1149
        %v1167 = vadd.s32 %v1159, %v1150
        %v1168 = vadd.s32 %v1159, %v1151
        %v1169 = vadd.s32 %v1159, %v1152
        %v1170 = vadd.s32 %v1159, %v1153
        %v1171 = vadd.s32 %v1159, %v1154
        %v1172 = vadd.s32 %v1159, %v1155
        %v1173 = vadd.s32 %v1159, %v1156
        %v1174 = vadd.s32 %v1159, %v1157
        %v1175 = vadd.s32 %v1159, %v1158
        %v1176 = vlaneseq
        %v1177 = vand.u32 %v1176, 127
        %vm1178 = vcmp.gt.s32.totalorder %v1160, %v1177
        %vm1179 = vcmp.gt.s32.totalorder %v1161, %v1177
        %vm1180 = vcmp.gt.s32.totalorder %v1162, %v1177
        %vm1181 = vcmp.gt.s32.totalorder %v1163, %v1177
        %vm1182 = vcmp.gt.s32.totalorder %v1164, %v1177
        %vm1183 = vcmp.gt.s32.totalorder %v1165, %v1177
        %vm1184 = vcmp.gt.s32.totalorder %v1166, %v1177
        %vm1185 = vcmp.gt.s32.totalorder %v1167, %v1177
        %vm1186 = vcmp.gt.s32.totalorder %v1168, %v1177
        %vm1187 = vcmp.gt.s32.totalorder %v1169, %v1177
        %vm1188 = vcmp.gt.s32.totalorder %v1170, %v1177
        %vm1189 = vcmp.gt.s32.totalorder %v1171, %v1177
        %vm1190 = vcmp.gt.s32.totalorder %v1172, %v1177
        %vm1191 = vcmp.gt.s32.totalorder %v1173, %v1177
        %vm1192 = vcmp.gt.s32.totalorder %v1174, %v1177
        %vm1193 = vcmp.gt.s32.totalorder %v1175, %v1177
        %v1194 = vsel %vm1178, -1.25e+11, 0.0
        %v1195 = vsel %vm1179, -1.25e+11, 0.0
        %v1196 = vsel %vm1180, -1.25e+11, 0.0
        %v1197 = vsel %vm1181, -1.25e+11, 0.0
        %v1198 = vsel %vm1182, -1.25e+11, 0.0
        %v1199 = vsel %vm1183, -1.25e+11, 0.0
        %v1200 = vsel %vm1184, -1.25e+11, 0.0
        %v1201 = vsel %vm1185, -1.25e+11, 0.0
        %v1202 = vsel %vm1186, -1.25e+11, 0.0
        %v1203 = vsel %vm1187, -1.25e+11, 0.0
        %v1204 = vsel %vm1188, -1.25e+11, 0.0
        %v1205 = vsel %vm1189, -1.25e+11, 0.0
        %v1206 = vsel %vm1190, -1.25e+11, 0.0
        %v1207 = vsel %vm1191, -1.25e+11, 0.0
        %v1208 = vsel %vm1192, -1.25e+11, 0.0
        %v1209 = vsel %vm1193, -1.25e+11, 0.0
        %v1210 = vperm.slane %v1141, 1
        %v1211 = vadd.f32 %v1210, %v1194
        %v1212 = vadd.f32 %v1210, %v1195
        %v1213 = vadd.f32 %v1210, %v1196
        %v1214 = vadd.f32 %v1210, %v1197
        %v1215 = vadd.f32 %v1210, %v1198
        %v1216 = vadd.f32 %v1210, %v1199
        %v1217 = vadd.f32 %v1210, %v1200
        %v1218 = vadd.f32 %v1210, %v1201
        %v1219 = vadd.f32 %v1210, %v1202
        %v1220 = vadd.f32 %v1210, %v1203
        %v1221 = vadd.f32 %v1210, %v1204
        %v1222 = vadd.f32 %v1210, %v1205
        %v1223 = vadd.f32 %v1210, %v1206
        %v1224 = vadd.f32 %v1210, %v1207
        %v1225 = vadd.f32 %v1210, %v1208
        %v1226 = vadd.f32 %v1210, %v1209
        %s1227 = sshra.s32 %s1140, 3
        %s1228 = sand.u32 %s1140, 7
        %s1229 = smul.u32 %s1227, 2
        %s1230 = smul.addr %s1229, 8
        %s1231 = scalar_lea.vmem [#allocation2], %s1230
        %v1232 = vld [vmem:[%s1231] sm:$0xff]
        %v1233 = vld [vmem:[%s1231 + $0x10] sm:$0xff]
        %v1234 = vld [vmem:[%s1231 + $0x20] sm:$0xff]
        %v1235 = vld [vmem:[%s1231 + $0x30] sm:$0xff]
        %v1236 = vld [vmem:[%s1231 + $0x40] sm:$0xff]
        %v1237 = vld [vmem:[%s1231 + $0x50] sm:$0xff]
        %v1238 = vld [vmem:[%s1231 + $0x60] sm:$0xff]
        %v1239 = vld [vmem:[%s1231 + $0x70] sm:$0xff]
        %v1240 = vld [vmem:[%s1231 + $0x80] sm:$0xff]
        %v1241 = vld [vmem:[%s1231 + $0x90] sm:$0xff]
        %v1242 = vld [vmem:[%s1231 + $0xa0] sm:$0xff]
        %v1243 = vld [vmem:[%s1231 + $0xb0] sm:$0xff]
        %v1244 = vld [vmem:[%s1231 + $0xc0] sm:$0xff]
        %v1245 = vld [vmem:[%s1231 + $0xd0] sm:$0xff]
        %v1246 = vld [vmem:[%s1231 + $0xe0] sm:$0xff]
        %v1247 = vld [vmem:[%s1231 + $0xf0] sm:$0xff]
        %v1248 = vld [vmem:[#allocation2] sm:$0xff]
        %v1249 = vld [vmem:[#allocation2 + $0x10] sm:$0xff]
        %v1250 = vld [vmem:[#allocation2 + $0x20] sm:$0xff]
        %v1251 = vld [vmem:[#allocation2 + $0x30] sm:$0xff]
        %v1252 = vld [vmem:[#allocation2 + $0x40] sm:$0xff]
        %v1253 = vld [vmem:[#allocation2 + $0x50] sm:$0xff]
        %v1254 = vld [vmem:[#allocation2 + $0x60] sm:$0xff]
        %v1255 = vld [vmem:[#allocation2 + $0x70] sm:$0xff]
        %v1256 = vld [vmem:[#allocation2 + $0x80] sm:$0xff]
        %v1257 = vld [vmem:[#allocation2 + $0x90] sm:$0xff]
        %v1258 = vld [vmem:[#allocation2 + $0xa0] sm:$0xff]
        %v1259 = vld [vmem:[#allocation2 + $0xb0] sm:$0xff]
        %v1260 = vld [vmem:[#allocation2 + $0xc0] sm:$0xff]
        %v1261 = vld [vmem:[#allocation2 + $0xd0] sm:$0xff]
        %v1262 = vld [vmem:[#allocation2 + $0xe0] sm:$0xff]
        %v1263 = vld [vmem:[#allocation2 + $0xf0] sm:$0xff]
        %1280 = vrot.lane.b32.xlu0 %v1248, 64
        %v1281 = vpop.permute.xlu0 %1280
        %1282 = vrot.lane.b32.xlu0 %v1249, 64
        %v1283 = vpop.permute.xlu0 %1282
        %1284 = vrot.lane.b32.xlu0 %v1250, 64
        %v1285 = vpop.permute.xlu0 %1284
        %1286 = vrot.lane.b32.xlu0 %v1251, 64
        %v1287 = vpop.permute.xlu0 %1286
        %1288 = vrot.lane.b32.xlu0 %v1252, 64
        %v1289 = vpop.permute.xlu0 %1288
        %1290 = vrot.lane.b32.xlu0 %v1253, 64
        %v1291 = vpop.permute.xlu0 %1290
        %1292 = vrot.lane.b32.xlu0 %v1254, 64
        %v1293 = vpop.permute.xlu0 %1292
        %1294 = vrot.lane.b32.xlu0 %v1255, 64
        %v1295 = vpop.permute.xlu0 %1294
        %1296 = vrot.lane.b32.xlu0 %v1256, 64
        %v1297 = vpop.permute.xlu0 %1296
        %1298 = vrot.lane.b32.xlu0 %v1257, 64
        %v1299 = vpop.permute.xlu0 %1298
        %1300 = vrot.lane.b32.xlu0 %v1258, 64
        %v1301 = vpop.permute.xlu0 %1300
        %1302 = vrot.lane.b32.xlu0 %v1259, 64
        %v1303 = vpop.permute.xlu0 %1302
        %1304 = vrot.lane.b32.xlu0 %v1260, 64
        %v1305 = vpop.permute.xlu0 %1304
        %1306 = vrot.lane.b32.xlu0 %v1261, 64
        %v1307 = vpop.permute.xlu0 %1306
        %1308 = vrot.lane.b32.xlu0 %v1262, 64
        %v1309 = vpop.permute.xlu0 %1308
        %1310 = vrot.lane.b32.xlu0 %v1263, 64
        %v1311 = vpop.permute.xlu0 %1310
        %vm1312 = vcmask 523264
        %v1314 = vsel %vm1312, %v1232, 0
        %v1317 = vsel %vm1312, %v1233, 0
        %v1320 = vsel %vm1312, %v1234, 0
        %v1323 = vsel %vm1312, %v1235, 0
        %v1326 = vsel %vm1312, %v1236, 0
        %v1329 = vsel %vm1312, %v1237, 0
        %v1332 = vsel %vm1312, %v1238, 0
        %v1335 = vsel %vm1312, %v1239, 0
        %v1338 = vsel %vm1312, %v1240, 0
        %v1341 = vsel %vm1312, %v1241, 0
        %v1344 = vsel %vm1312, %v1242, 0
        %v1347 = vsel %vm1312, %v1243, 0
        %v1350 = vsel %vm1312, %v1244, 0
        %v1353 = vsel %vm1312, %v1245, 0
        %v1356 = vsel %vm1312, %v1246, 0
        %v1359 = vsel %vm1312, %v1247, 0
        %v1361 = vsel %vm1312, %v1281, 0
        %v1363 = vsel %vm1312, %v1283, 0
        %v1365 = vsel %vm1312, %v1285, 0
        %v1367 = vsel %vm1312, %v1287, 0
        %v1369 = vsel %vm1312, %v1289, 0
        %v1371 = vsel %vm1312, %v1291, 0
        %v1373 = vsel %vm1312, %v1293, 0
        %v1375 = vsel %vm1312, %v1295, 0
        %v1377 = vsel %vm1312, %v1297, 0
        %v1379 = vsel %vm1312, %v1299, 0
        %v1381 = vsel %vm1312, %v1301, 0
        %v1383 = vsel %vm1312, %v1303, 0
        %v1385 = vsel %vm1312, %v1305, 0
        %v1387 = vsel %vm1312, %v1307, 0
        %v1389 = vsel %vm1312, %v1309, 0
        %v1391 = vsel %vm1312, %v1311, 0
        %1393 = vmatpush.xpose.msra.mxu0 %v1391
        %1394 = vmatpush.xpose.msra.mxu0 %v1389
        %1395 = vmatpush.xpose.msra.mxu0 %v1387
        %1396 = vmatpush.xpose.msra.mxu0 %v1385
        %1397 = vmatpush.xpose.msra.mxu0 %v1383
        %1398 = vmatpush.xpose.msra.mxu0 %v1381
        %1399 = vmatpush.xpose.msra.mxu0 %v1379
        %1400 = vmatpush.xpose.msra.mxu0 %v1377
        %1401 = vmatpush.xpose.msra.mxu0 %v1375
        %1402 = vmatpush.xpose.msra.mxu0 %v1373
        %1403 = vmatpush.xpose.msra.mxu0 %v1371
        %1404 = vmatpush.xpose.msra.mxu0 %v1369
        %1405 = vmatpush.xpose.msra.mxu0 %v1367
        %1406 = vmatpush.xpose.msra.mxu0 %v1365
        %1407 = vmatpush.xpose.msra.mxu0 %v1363
        %1408 = vmatpush.xpose.msra.mxu0 %v1361
        %1409 = vmatmul.f32.gmra.mxu0 %v1314
        %v1410 = vpop.f32.mrf.mxu0
        %v1411 = vadd.f32 0.0, %v1410
        %1412 = vmatmul.f32.gmra.mxu0 %v1317
        %v1413 = vpop.f32.mrf.mxu0
        %v1414 = vadd.f32 0.0, %v1413
        %1415 = vmatmul.f32.gmra.mxu0 %v1320
        %v1416 = vpop.f32.mrf.mxu0
        %v1417 = vadd.f32 0.0, %v1416
        %1418 = vmatmul.f32.gmra.mxu0 %v1323
        %v1419 = vpop.f32.mrf.mxu0
        %v1420 = vadd.f32 0.0, %v1419
        %1421 = vmatmul.f32.gmra.mxu0 %v1326
        %v1422 = vpop.f32.mrf.mxu0
        %v1423 = vadd.f32 0.0, %v1422
        %1424 = vmatmul.f32.gmra.mxu0 %v1329
        %v1425 = vpop.f32.mrf.mxu0
        %v1426 = vadd.f32 0.0, %v1425
        %1427 = vmatmul.f32.gmra.mxu0 %v1332
        %v1428 = vpop.f32.mrf.mxu0
        %v1429 = vadd.f32 0.0, %v1428
        %1430 = vmatmul.f32.gmra.mxu0 %v1335
        %v1431 = vpop.f32.mrf.mxu0
        %v1432 = vadd.f32 0.0, %v1431
        %1433 = vmatmul.f32.gmra.mxu0 %v1338
        %v1434 = vpop.f32.mrf.mxu0
        %v1435 = vadd.f32 0.0, %v1434
        %1436 = vmatmul.f32.gmra.mxu0 %v1341
        %v1437 = vpop.f32.mrf.mxu0
        %v1438 = vadd.f32 0.0, %v1437
        %1439 = vmatmul.f32.gmra.mxu0 %v1344
        %v1440 = vpop.f32.mrf.mxu0
        %v1441 = vadd.f32 0.0, %v1440
        %1442 = vmatmul.f32.gmra.mxu0 %v1347
        %v1443 = vpop.f32.mrf.mxu0
        %v1444 = vadd.f32 0.0, %v1443
        %1445 = vmatmul.f32.gmra.mxu0 %v1350
        %v1446 = vpop.f32.mrf.mxu0
        %v1447 = vadd.f32 0.0, %v1446
        %1448 = vmatmul.f32.gmra.mxu0 %v1353
        %v1449 = vpop.f32.mrf.mxu0
        %v1450 = vadd.f32 0.0, %v1449
        %1451 = vmatmul.f32.gmra.mxu0 %v1356
        %v1452 = vpop.f32.mrf.mxu0
        %v1453 = vadd.f32 0.0, %v1452
        %1454 = vmatmul.f32.gmra.mxu0 %v1359
        %v1455 = vpop.f32.mrf.mxu0
        %v1456 = vadd.f32 0.0, %v1455
        %1457 = vdwg.mxu0
        %v1458 = vperm.slane %v1141, 0
        %v1459 = vmul.f32 %v1411, %v1458
        %v1460 = vmul.f32 %v1414, %v1458
        %v1461 = vmul.f32 %v1417, %v1458
        %v1462 = vmul.f32 %v1420, %v1458
        %v1463 = vmul.f32 %v1423, %v1458
        %v1464 = vmul.f32 %v1426, %v1458
        %v1465 = vmul.f32 %v1429, %v1458
        %v1466 = vmul.f32 %v1432, %v1458
        %v1467 = vmul.f32 %v1435, %v1458
        %v1468 = vmul.f32 %v1438, %v1458
        %v1469 = vmul.f32 %v1441, %v1458
        %v1470 = vmul.f32 %v1444, %v1458
        %v1471 = vmul.f32 %v1447, %v1458
        %v1472 = vmul.f32 %v1450, %v1458
        %v1473 = vmul.f32 %v1453, %v1458
        %v1474 = vmul.f32 %v1456, %v1458
        %v1475 = vadd.f32 %v1459, %v1211
        %v1476 = vadd.f32 %v1460, %v1212
        %v1477 = vadd.f32 %v1461, %v1213
        %v1478 = vadd.f32 %v1462, %v1214
        %v1479 = vadd.f32 %v1463, %v1215
        %v1480 = vadd.f32 %v1464, %v1216
        %v1481 = vadd.f32 %v1465, %v1217
        %v1482 = vadd.f32 %v1466, %v1218
        %v1483 = vadd.f32 %v1467, %v1219
        %v1484 = vadd.f32 %v1468, %v1220
        %v1485 = vadd.f32 %v1469, %v1221
        %v1486 = vadd.f32 %v1470, %v1222
        %v1487 = vadd.f32 %v1471, %v1223
        %v1488 = vadd.f32 %v1472, %v1224
        %v1489 = vadd.f32 %v1473, %v1225
        %v1490 = vadd.f32 %v1474, %v1226
        %1491 = vst [vmem:[%s395] sm:$0xff] %v1475
        %1492 = vst [vmem:[%s395 + $0x8] sm:$0xff] %v1476
        %1493 = vst [vmem:[%s395 + $0x10] sm:$0xff] %v1477
        %1494 = vst [vmem:[%s395 + $0x18] sm:$0xff] %v1478
        %1495 = vst [vmem:[%s395 + $0x20] sm:$0xff] %v1479
        %1496 = vst [vmem:[%s395 + $0x28] sm:$0xff] %v1480
        %1497 = vst [vmem:[%s395 + $0x30] sm:$0xff] %v1481
        %1498 = vst [vmem:[%s395 + $0x38] sm:$0xff] %v1482
        %1499 = vst [vmem:[%s395 + $0x40] sm:$0xff] %v1483
        %1500 = vst [vmem:[%s395 + $0x48] sm:$0xff] %v1484
        %1501 = vst [vmem:[%s395 + $0x50] sm:$0xff] %v1485
        %1502 = vst [vmem:[%s395 + $0x58] sm:$0xff] %v1486
        %1503 = vst [vmem:[%s395 + $0x60] sm:$0xff] %v1487
        %1504 = vst [vmem:[%s395 + $0x68] sm:$0xff] %v1488
        %1505 = vst [vmem:[%s395 + $0x70] sm:$0xff] %v1489
        %1506 = vst [vmem:[%s395 + $0x78] sm:$0xff] %v1490
        %v1507 = vld [vmem:[%s1231 + $0x8] sm:$0xff]
        %v1508 = vld [vmem:[%s1231 + $0x18] sm:$0xff]
        %v1509 = vld [vmem:[%s1231 + $0x28] sm:$0xff]
        %v1510 = vld [vmem:[%s1231 + $0x38] sm:$0xff]
        %v1511 = vld [vmem:[%s1231 + $0x48] sm:$0xff]
        %v1512 = vld [vmem:[%s1231 + $0x58] sm:$0xff]
        %v1513 = vld [vmem:[%s1231 + $0x68] sm:$0xff]
        %v1514 = vld [vmem:[%s1231 + $0x78] sm:$0xff]
        %v1515 = vld [vmem:[%s1231 + $0x88] sm:$0xff]
        %v1516 = vld [vmem:[%s1231 + $0x98] sm:$0xff]
        %v1517 = vld [vmem:[%s1231 + $0xa8] sm:$0xff]
        %v1518 = vld [vmem:[%s1231 + $0xb8] sm:$0xff]
        %v1519 = vld [vmem:[%s1231 + $0xc8] sm:$0xff]
        %v1520 = vld [vmem:[%s1231 + $0xd8] sm:$0xff]
        %v1521 = vld [vmem:[%s1231 + $0xe8] sm:$0xff]
        %v1522 = vld [vmem:[%s1231 + $0xf8] sm:$0xff]
        %v1523 = vld [vmem:[#allocation2 + $0x8] sm:$0xff]
        %v1524 = vld [vmem:[#allocation2 + $0x18] sm:$0xff]
        %v1525 = vld [vmem:[#allocation2 + $0x28] sm:$0xff]
        %v1526 = vld [vmem:[#allocation2 + $0x38] sm:$0xff]
        %v1527 = vld [vmem:[#allocation2 + $0x48] sm:$0xff]
        %v1528 = vld [vmem:[#allocation2 + $0x58] sm:$0xff]
        %v1529 = vld [vmem:[#allocation2 + $0x68] sm:$0xff]
        %v1530 = vld [vmem:[#allocation2 + $0x78] sm:$0xff]
        %v1531 = vld [vmem:[#allocation2 + $0x88] sm:$0xff]
        %v1532 = vld [vmem:[#allocation2 + $0x98] sm:$0xff]
        %v1533 = vld [vmem:[#allocation2 + $0xa8] sm:$0xff]
        %v1534 = vld [vmem:[#allocation2 + $0xb8] sm:$0xff]
        %v1535 = vld [vmem:[#allocation2 + $0xc8] sm:$0xff]
        %v1536 = vld [vmem:[#allocation2 + $0xd8] sm:$0xff]
        %v1537 = vld [vmem:[#allocation2 + $0xe8] sm:$0xff]
        %v1538 = vld [vmem:[#allocation2 + $0xf8] sm:$0xff]
        %1555 = vrot.lane.b32.xlu0 %v1523, 64
        %v1556 = vpop.permute.xlu0 %1555
        %1557 = vrot.lane.b32.xlu0 %v1524, 64
        %v1558 = vpop.permute.xlu0 %1557
        %1559 = vrot.lane.b32.xlu0 %v1525, 64
        %v1560 = vpop.permute.xlu0 %1559
        %1561 = vrot.lane.b32.xlu0 %v1526, 64
        %v1562 = vpop.permute.xlu0 %1561
        %1563 = vrot.lane.b32.xlu0 %v1527, 64
        %v1564 = vpop.permute.xlu0 %1563
        %1565 = vrot.lane.b32.xlu0 %v1528, 64
        %v1566 = vpop.permute.xlu0 %1565
        %1567 = vrot.lane.b32.xlu0 %v1529, 64
        %v1568 = vpop.permute.xlu0 %1567
        %1569 = vrot.lane.b32.xlu0 %v1530, 64
        %v1570 = vpop.permute.xlu0 %1569
        %1571 = vrot.lane.b32.xlu0 %v1531, 64
        %v1572 = vpop.permute.xlu0 %1571
        %1573 = vrot.lane.b32.xlu0 %v1532, 64
        %v1574 = vpop.permute.xlu0 %1573
        %1575 = vrot.lane.b32.xlu0 %v1533, 64
        %v1576 = vpop.permute.xlu0 %1575
        %1577 = vrot.lane.b32.xlu0 %v1534, 64
        %v1578 = vpop.permute.xlu0 %1577
        %1579 = vrot.lane.b32.xlu0 %v1535, 64
        %v1580 = vpop.permute.xlu0 %1579
        %1581 = vrot.lane.b32.xlu0 %v1536, 64
        %v1582 = vpop.permute.xlu0 %1581
        %1583 = vrot.lane.b32.xlu0 %v1537, 64
        %v1584 = vpop.permute.xlu0 %1583
        %1585 = vrot.lane.b32.xlu0 %v1538, 64
        %v1586 = vpop.permute.xlu0 %1585
        %v1588 = vsel %vm1312, %v1507, 0
        %v1591 = vsel %vm1312, %v1508, 0
        %v1594 = vsel %vm1312, %v1509, 0
        %v1597 = vsel %vm1312, %v1510, 0
        %v1600 = vsel %vm1312, %v1511, 0
        %v1603 = vsel %vm1312, %v1512, 0
        %v1606 = vsel %vm1312, %v1513, 0
        %v1609 = vsel %vm1312, %v1514, 0
        %v1612 = vsel %vm1312, %v1515, 0
        %v1615 = vsel %vm1312, %v1516, 0
        %v1618 = vsel %vm1312, %v1517, 0
        %v1621 = vsel %vm1312, %v1518, 0
        %v1624 = vsel %vm1312, %v1519, 0
        %v1627 = vsel %vm1312, %v1520, 0
        %v1630 = vsel %vm1312, %v1521, 0
        %v1633 = vsel %vm1312, %v1522, 0
        %v1635 = vsel %vm1312, %v1556, 0
        %v1637 = vsel %vm1312, %v1558, 0
        %v1639 = vsel %vm1312, %v1560, 0
        %v1641 = vsel %vm1312, %v1562, 0
        %v1643 = vsel %vm1312, %v1564, 0
        %v1645 = vsel %vm1312, %v1566, 0
        %v1647 = vsel %vm1312, %v1568, 0
        %v1649 = vsel %vm1312, %v1570, 0
        %v1651 = vsel %vm1312, %v1572, 0
        %v1653 = vsel %vm1312, %v1574, 0
        %v1655 = vsel %vm1312, %v1576, 0
        %v1657 = vsel %vm1312, %v1578, 0
        %v1659 = vsel %vm1312, %v1580, 0
        %v1661 = vsel %vm1312, %v1582, 0
        %v1663 = vsel %vm1312, %v1584, 0
        %v1665 = vsel %vm1312, %v1586, 0
        %1667 = vmatpush.xpose.msra.mxu0 %v1665
        %1668 = vmatpush.xpose.msra.mxu0 %v1663
        %1669 = vmatpush.xpose.msra.mxu0 %v1661
        %1670 = vmatpush.xpose.msra.mxu0 %v1659
        %1671 = vmatpush.xpose.msra.mxu0 %v1657
        %1672 = vmatpush.xpose.msra.mxu0 %v1655
        %1673 = vmatpush.xpose.msra.mxu0 %v1653
        %1674 = vmatpush.xpose.msra.mxu0 %v1651
        %1675 = vmatpush.xpose.msra.mxu0 %v1649
        %1676 = vmatpush.xpose.msra.mxu0 %v1647
        %1677 = vmatpush.xpose.msra.mxu0 %v1645
        %1678 = vmatpush.xpose.msra.mxu0 %v1643
        %1679 = vmatpush.xpose.msra.mxu0 %v1641
        %1680 = vmatpush.xpose.msra.mxu0 %v1639
        %1681 = vmatpush.xpose.msra.mxu0 %v1637
        %1682 = vmatpush.xpose.msra.mxu0 %v1635
        %1683 = vmatmul.f32.gmra.mxu0 %v1588
        %v1684 = vpop.f32.mrf.mxu0
        %v1685 = vadd.f32 0.0, %v1684
        %1686 = vmatmul.f32.gmra.mxu0 %v1591
        %v1687 = vpop.f32.mrf.mxu0
        %v1688 = vadd.f32 0.0, %v1687
        %1689 = vmatmul.f32.gmra.mxu0 %v1594
        %v1690 = vpop.f32.mrf.mxu0
        %v1691 = vadd.f32 0.0, %v1690
        %1692 = vmatmul.f32.gmra.mxu0 %v1597
        %v1693 = vpop.f32.mrf.mxu0
        %v1694 = vadd.f32 0.0, %v1693
        %1695 = vmatmul.f32.gmra.mxu0 %v1600
        %v1696 = vpop.f32.mrf.mxu0
        %v1697 = vadd.f32 0.0, %v1696
        %1698 = vmatmul.f32.gmra.mxu0 %v1603
        %v1699 = vpop.f32.mrf.mxu0
        %v1700 = vadd.f32 0.0, %v1699
        %1701 = vmatmul.f32.gmra.mxu0 %v1606
        %v1702 = vpop.f32.mrf.mxu0
        %v1703 = vadd.f32 0.0, %v1702
        %1704 = vmatmul.f32.gmra.mxu0 %v1609
        %v1705 = vpop.f32.mrf.mxu0
        %v1706 = vadd.f32 0.0, %v1705
        %1707 = vmatmul.f32.gmra.mxu0 %v1612
        %v1708 = vpop.f32.mrf.mxu0
        %v1709 = vadd.f32 0.0, %v1708
        %1710 = vmatmul.f32.gmra.mxu0 %v1615
        %v1711 = vpop.f32.mrf.mxu0
        %v1712 = vadd.f32 0.0, %v1711
        %1713 = vmatmul.f32.gmra.mxu0 %v1618
        %v1714 = vpop.f32.mrf.mxu0
        %v1715 = vadd.f32 0.0, %v1714
        %1716 = vmatmul.f32.gmra.mxu0 %v1621
        %v1717 = vpop.f32.mrf.mxu0
        %v1718 = vadd.f32 0.0, %v1717
        %1719 = vmatmul.f32.gmra.mxu0 %v1624
        %v1720 = vpop.f32.mrf.mxu0
        %v1721 = vadd.f32 0.0, %v1720
        %1722 = vmatmul.f32.gmra.mxu0 %v1627
        %v1723 = vpop.f32.mrf.mxu0
        %v1724 = vadd.f32 0.0, %v1723
        %1725 = vmatmul.f32.gmra.mxu0 %v1630
        %v1726 = vpop.f32.mrf.mxu0
        %v1727 = vadd.f32 0.0, %v1726
        %1728 = vmatmul.f32.gmra.mxu0 %v1633
        %v1729 = vpop.f32.mrf.mxu0
        %v1730 = vadd.f32 0.0, %v1729
        %1731 = vdwg.mxu0
        %v1732 = vmul.f32 %v1685, %v1458
        %v1733 = vmul.f32 %v1688, %v1458
        %v1734 = vmul.f32 %v1691, %v1458
        %v1735 = vmul.f32 %v1694, %v1458
        %v1736 = vmul.f32 %v1697, %v1458
        %v1737 = vmul.f32 %v1700, %v1458
        %v1738 = vmul.f32 %v1703, %v1458
        %v1739 = vmul.f32 %v1706, %v1458
        %v1740 = vmul.f32 %v1709, %v1458
        %v1741 = vmul.f32 %v1712, %v1458
        %v1742 = vmul.f32 %v1715, %v1458
        %v1743 = vmul.f32 %v1718, %v1458
        %v1744 = vmul.f32 %v1721, %v1458
        %v1745 = vmul.f32 %v1724, %v1458
        %v1746 = vmul.f32 %v1727, %v1458
        %v1747 = vmul.f32 %v1730, %v1458
        %v1748 = vadd.f32 %v1732, %v1211
        %v1749 = vadd.f32 %v1733, %v1212
        %v1750 = vadd.f32 %v1734, %v1213
        %v1751 = vadd.f32 %v1735, %v1214
        %v1752 = vadd.f32 %v1736, %v1215
        %v1753 = vadd.f32 %v1737, %v1216
        %v1754 = vadd.f32 %v1738, %v1217
        %v1755 = vadd.f32 %v1739, %v1218
        %v1756 = vadd.f32 %v1740, %v1219
        %v1757 = vadd.f32 %v1741, %v1220
        %v1758 = vadd.f32 %v1742, %v1221
        %v1759 = vadd.f32 %v1743, %v1222
        %v1760 = vadd.f32 %v1744, %v1223
        %v1761 = vadd.f32 %v1745, %v1224
        %v1762 = vadd.f32 %v1746, %v1225
        %v1763 = vadd.f32 %v1747, %v1226
        %s1764 = scalar_lea.vmem %s395, 128 [#allocation9]
        %1765 = vst [vmem:[%s1764] sm:$0xff] %v1748
        %1766 = vst [vmem:[%s1764 + $0x8] sm:$0xff] %v1749
        %1767 = vst [vmem:[%s1764 + $0x10] sm:$0xff] %v1750
        %1768 = vst [vmem:[%s1764 + $0x18] sm:$0xff] %v1751
        %1769 = vst [vmem:[%s1764 + $0x20] sm:$0xff] %v1752
        %1770 = vst [vmem:[%s1764 + $0x28] sm:$0xff] %v1753
        %1771 = vst [vmem:[%s1764 + $0x30] sm:$0xff] %v1754
        %1772 = vst [vmem:[%s1764 + $0x38] sm:$0xff] %v1755
        %1773 = vst [vmem:[%s1764 + $0x40] sm:$0xff] %v1756
        %1774 = vst [vmem:[%s1764 + $0x48] sm:$0xff] %v1757
        %1775 = vst [vmem:[%s1764 + $0x50] sm:$0xff] %v1758
        %1776 = vst [vmem:[%s1764 + $0x58] sm:$0xff] %v1759
        %1777 = vst [vmem:[%s1764 + $0x60] sm:$0xff] %v1760
        %1778 = vst [vmem:[%s1764 + $0x68] sm:$0xff] %v1761
        %1779 = vst [vmem:[%s1764 + $0x70] sm:$0xff] %v1762
        %1780 = vst [vmem:[%s1764 + $0x78] sm:$0xff] %v1763
        %s1781 = sand.u32 %s223, 1
        %s1782 = scalar_lea.sflag [#allocation5], %s1781
        %s1783 = sand.u32 %s223, 1
        %s1784 = smul.addr %s1783, 256
        %s1785 = scalar_lea.vmem [#allocation9], %s1784
        // Predicated region
        $region65: #{tpu_custom_call.1} parent=47 // pred_check
          %p1786 = pneg %p233
        $region66: #{tpu_custom_call.1} parent=47 // pred_check_branch
          %1788 = sbr.rel (%p1786) target = $region68
        $region67: #{tpu_custom_call.1} parent=47 // pred_region
          %s1789 = smul.u32 2, %s31
          %s1790 = smul.u32 16, %s32
          %1792 = vsyncadd %s1782, 0
          %s1793 = smul.addr %s1789, 16
          %s1794 = sadd.s32 %s1790, %s1793
          %s1795 = smul.addr %s30, 64
          %s1796 = sadd.s32 %s1794, %s1795
          %s1797 = smul.addr %s1796, 8
          %s1798 = scalar_lea.hbm %s7, %s1797
          %s1799 = sshll.u32 %s1785, 4
          %s1800 = int_to_ptr.vmem [resolvable:$true] %s1799
          %s1801 = sshll.u32 %s1798, 4
          %s1802 = int_to_ptr.hbm [resolvable:$true] %s1801
          %1807 = dma.vmem_to_hbm [thread:$0]  %s1800, 4096, %s1802, %s1782, 128, 128, 8
        $region68: #{tpu_custom_call.1} parent=47 // pred_fallthru
          _
      $region48: #{tpu_custom_call.1} parent=5 // pred_fallthru
        _
      %p1808 = scmp.le.s32.totalorder 2, %s20
      // Predicated region
      $region69: #{tpu_custom_call.1} parent=5 // pred_check
        %p1809 = pneg %p1808
      $region70: #{tpu_custom_call.1} parent=5 // pred_check_branch
        %1811 = sbr.rel (%p1809) target = $region72
      $region71: #{tpu_custom_call.1} parent=5 // pred_region
        %s1812 = ssub.s32 %s20, 2
        // Predicated region
        $region73: #{tpu_custom_call.1} parent=71 // pred_check
          %p1813 = pneg %p239
        $region74: #{tpu_custom_call.1} parent=71 // pred_check_branch
          %1815 = sbr.rel (%p1813) target = $region76
        $region75: #{tpu_custom_call.1} parent=71 // pred_region
          %s1816 = sand.u32 %s224, 1
          %s1817 = scalar_lea.sflag [#allocation5], %s1816
          %s1818 = sand.u32 %s224, 1
          %s1819 = smul.addr %s1818, 256
          %s1820 = scalar_lea.vmem [#allocation9], %s1819
          %1822 = dma.done %s1817, 4096
        $region76: #{tpu_custom_call.1} parent=71 // pred_fallthru
          _
      $region72: #{tpu_custom_call.1} parent=5 // pred_fallthru
        _
    $region6: #{tpu_custom_call.1} parent=1 // loop_footer
      %s24 = sadd.s32 1, %s20
    $region7: #{tpu_custom_call.1} parent=1 // loop_footer_branch
      %19 = sbr.rel target = $region3
    $region8: #{tpu_custom_call.1} parent=1 // loop_exit
      _
    %1823 = vsyncpa [#allocation4], 1
    %s1824 = scalar_lea.sflag [#allocation4], 1
    %1825 = vsyncpa %s1824, 1
    %1826 = vsyncpa [#allocation7], 1
    %1827 = vsyncpa [#allocation5], 1
    %s1828 = scalar_lea.sflag [#allocation5], 1
    %1829 = vsyncpa %s1828, 1

</llo_original>
